<compile_context>
chip_gen: v7x
topology: tpu7x:2x2x1
jax: 0.10.0
libtpu: 0.0.40
codegen_flags: <defaults>
</compile_context>

<pallas_src>
import functools
import math

import jax
import jax.numpy as jnp
from jax.experimental import pallas as pl
from jax.experimental.pallas import tpu as pltpu

_LN_EPS = 1e-5


def _erf_poly(x):
    # Abramowitz & Stegun 7.1.26 (max abs err ~1.5e-7).  Avoids relying on an
    # erf lowering inside Mosaic; uses only exp / mul / add / where.
    a1, a2, a3, a4, a5 = (0.254829592, -0.284496736, 1.421413741,
                          -1.453152027, 1.061405429)
    pcoef = 0.3275911
    ax = jnp.abs(x)
    t = 1.0 / (1.0 + pcoef * ax)
    poly = ((((a5 * t + a4) * t + a3) * t + a2) * t + a1) * t
    y = 1.0 - poly * jnp.exp(-ax * ax)
    return jnp.where(x >= 0.0, y, -y)


def _gelu_exact(x):
    # Matches PyTorch F.gelu (erf form) to ~1.5e-7.
    return 0.5 * x * (1.0 + _erf_poly(x * (1.0 / math.sqrt(2.0))))


def _layernorm(x, gamma, beta):
    mu = jnp.mean(x, axis=-1, keepdims=True)
    var = jnp.mean(jnp.square(x - mu), axis=-1, keepdims=True)
    return (x - mu) * jax.lax.rsqrt(var + _LN_EPS) * gamma + beta


# ----------------------------------------------------------------------------
# Kernel 1: ln_1 + per-head-block attention + fused out-projection + residual
# ----------------------------------------------------------------------------
def _mhsa_kernel(x_ref, g1_ref, beta1_ref, w_in_ref, b_in_ref, w_aw_ref,
                 b_aw_ref, w_out_ref, b_out_ref,            # inputs
                 resid_ref, probs_ref,                      # outputs
                 xln_sc, acc_sc,                            # VMEM scratch
                 *, heads_per_step, head_dim, compute_dtype, approx_recip):
    kblk = pl.program_id(1)
    nblk = pl.num_programs(1)

    @pl.when(kblk == 0)
    def _():
        # ln_1 once per batch row-block; keep it resident across head blocks.
        xln_sc[...] = _layernorm(x_ref[0], g1_ref[...], beta1_ref[...])
        acc_sc[...] = jnp.zeros_like(acc_sc)

    xc = xln_sc[...].astype(compute_dtype)                  # (seq, D)
    # in-projection for this block of heads (+ attn_weight folded in).
    xh = jnp.dot(xc, w_in_ref[0],
                 preferred_element_type=jnp.float32) + b_in_ref[0]   # (seq, HB*hd)
    t = (jnp.dot(xc, w_aw_ref[0],
                 preferred_element_type=jnp.float32) + b_aw_ref[0]) * (1.0 / head_dim)

    o_parts = []
    for j in range(heads_per_step):
        sl = slice(j * head_dim, (j + 1) * head_dim)
        xh_j = xh[:, sl].astype(compute_dtype)              # (seq, hd)
        t_j = t[:, sl].astype(compute_dtype)                # (seq, hd)
        # scores: contract the last dims of both operands ("NT" matmul, no
        # materialized transpose).  1/head_dim already applied to t.
        s = jax.lax.dot_general(t_j, xh_j, (((1,), (1,)), ((), ())),
                                preferred_element_type=jnp.float32)   # (seq, seq)
        m = jnp.max(s, axis=-1, keepdims=True)
        e = jnp.exp(s - m)
        l = jnp.sum(e, axis=-1, keepdims=True)
        p = e * pl.reciprocal(l, approx=approx_recip)
        probs_ref[0, j] = p
        # TODO(synk): attn_dropout is identity (eval semantics).
        o_parts.append(jnp.dot(p.astype(compute_dtype), xh_j,
                               preferred_element_type=jnp.float32))   # (seq, hd)

    o_blk = o_parts[0] if heads_per_step == 1 else jnp.concatenate(o_parts, axis=-1)
    # out-projection contribution of this head block (reduction over kblk).
    acc_sc[...] += jnp.dot(o_blk.astype(compute_dtype), w_out_ref[0],
                           preferred_element_type=jnp.float32)        # (seq, D)

    @pl.when(kblk == nblk - 1)
    def _():
        # + bias + residual with the block input (drop == identity in eval).
        resid_ref[0] = (acc_sc[...] + b_out_ref[...] + x_ref[0]).astype(resid_ref.dtype)


# ----------------------------------------------------------------------------
# Kernel 2: ln_2 + MLP (Linear -> exact GELU -> Linear) + residual
# ----------------------------------------------------------------------------
def _mlp_kernel(x_ref, g2_ref, beta2_ref, w1_ref, b1_ref, w2_ref, b2_ref,
                o_ref, *, compute_dtype):
    x = x_ref[0]                                            # (seq, D) = attn_out + inputs
    y = _layernorm(x, g2_ref[...], beta2_ref[...])
    h = jnp.dot(y.astype(compute_dtype), w1_ref[...],
                preferred_element_type=jnp.float32) + b1_ref[...]
    h = _gelu_exact(h)
    # TODO(synk): mlp dropout / block dropout are identity (eval semantics).
    y2 = jnp.dot(h.astype(compute_dtype), w2_ref[...],
                 preferred_element_type=jnp.float32) + b2_ref[...]
    o_ref[0] = (y2 + x).astype(o_ref.dtype)


def _pick_heads_per_step(num_heads, head_dim, target_width=128):
    """Block enough heads per grid step to roughly fill an MXU tile width."""
    hb = max(1, min(num_heads, target_width // max(head_dim, 1)))
    while num_heads % hb:
        hb -= 1
    return hb


def optimized_mhsa_block(inputs, params, *, num_heads,
                         compute_dtype=jnp.float32, heads_per_step=None):
    """inputs: (bsz, seq, model_dim) f32 -> (block_output, attn_probs)."""
    bsz, seq, model_dim = inputs.shape
    head_dim = model_dim // num_heads
    assert head_dim * num_heads == model_dim
    if heads_per_step is None:
        heads_per_step = _pick_heads_per_step(num_heads, head_dim)
    hb = heads_per_step
    nblk = num_heads // hb
    f32 = jnp.float32
    use_bf16 = jnp.dtype(compute_dtype) != jnp.dtype(jnp.float32)

    # --- fold attn_weight into the in-projection; group params per head block.
    w_in = params["w_in"].astype(f32)                       # (D, D)  (in, out)
    b_in = params["b_in"].astype(f32)                       # (D,)
    attn_w = params["attn_weight"].astype(f32)              # (H, hd, hd)

    w_in_h = w_in.reshape(model_dim, num_heads, head_dim)   # (D, H, hd)
    b_in_h = b_in.reshape(num_heads, 1, head_dim)           # (H, 1, hd)
    w_aw_h = jnp.einsum("dhe,hef->dhf", w_in_h, attn_w)     # (D, H, hd)
    b_aw_h = jnp.einsum("hoe,hef->hof", b_in_h, attn_w)     # (H, 1, hd)

    w_in_b = w_in_h.reshape(model_dim, nblk, hb * head_dim).transpose(1, 0, 2)
    w_aw_b = w_aw_h.reshape(model_dim, nblk, hb * head_dim).transpose(1, 0, 2)
    b_in_b = b_in_h.reshape(nblk, 1, hb * head_dim)
    b_aw_b = b_aw_h.reshape(nblk, 1, hb * head_dim)
    w_out_b = params["w_out"].astype(f32).reshape(nblk, hb * head_dim, model_dim)
    b_out = params["b_out"].astype(f32).reshape(1, model_dim)
    g1 = params["ln1_gamma"].astype(f32).reshape(1, model_dim)
    be1 = params["ln1_beta"].astype(f32).reshape(1, model_dim)
    g2 = params["ln2_gamma"].astype(f32).reshape(1, model_dim)
    be2 = params["ln2_beta"].astype(f32).reshape(1, model_dim)
    w1 = params["w1"]
    b1 = params["b1"].astype(f32).reshape(1, -1)
    w2 = params["w2"]
    b2 = params["b2"].astype(f32).reshape(1, model_dim)
    mlp_dim = w1.shape[1]

    # MXU inputs in compute_dtype (bf16 option); biases / LN params stay f32.
    w_in_b = w_in_b.astype(compute_dtype)
    w_aw_b = w_aw_b.astype(compute_dtype)
    w_out_b = w_out_b.astype(compute_dtype)
    w1 = w1.astype(compute_dtype)
    w2 = w2.astype(compute_dtype)

    hbd = hb * head_dim

    attn_call = pl.pallas_call(
        functools.partial(_mhsa_kernel, heads_per_step=hb, head_dim=head_dim,
                          compute_dtype=compute_dtype, approx_recip=use_bf16),
        grid=(bsz, nblk),
        in_specs=[
            pl.BlockSpec((1, seq, model_dim), lambda b, k: (b, 0, 0)),    # inputs
            pl.BlockSpec((1, model_dim), lambda b, k: (0, 0)),            # ln1 gamma
            pl.BlockSpec((1, model_dim), lambda b, k: (0, 0)),            # ln1 beta
            pl.BlockSpec((1, model_dim, hbd), lambda b, k: (k, 0, 0)),    # W_in block
            pl.BlockSpec((1, 1, hbd), lambda b, k: (k, 0, 0)),            # b_in block
            pl.BlockSpec((1, model_dim, hbd), lambda b, k: (k, 0, 0)),    # W_in@attn_w
            pl.BlockSpec((1, 1, hbd), lambda b, k: (k, 0, 0)),            # b_in@attn_w
            pl.BlockSpec((1, hbd, model_dim), lambda b, k: (k, 0, 0)),    # W_out block
            pl.BlockSpec((1, model_dim), lambda b, k: (0, 0)),            # b_out
        ],
        out_specs=[
            pl.BlockSpec((1, seq, model_dim), lambda b, k: (b, 0, 0)),    # attn+resid
            pl.BlockSpec((1, hb, seq, seq), lambda b, k: (b, k, 0, 0)),   # attn probs
        ],
        out_shape=[
            jax.ShapeDtypeStruct((bsz, seq, model_dim), jnp.float32),
            jax.ShapeDtypeStruct((bsz, num_heads, seq, seq), jnp.float32),
        ],
        scratch_shapes=[
            pltpu.VMEM((seq, model_dim), jnp.float32),   # ln_1(x), resident per batch
            pltpu.VMEM((seq, model_dim), jnp.float32),   # out-projection accumulator
        ],
        compiler_params=pltpu.CompilerParams(
            dimension_semantics=("parallel", "arbitrary")),
    )
    resid1, attn_probs = attn_call(inputs, g1, be1, w_in_b, b_in_b, w_aw_b,
                                   b_aw_b, w_out_b, b_out)

    mlp_call = pl.pallas_call(
        functools.partial(_mlp_kernel, compute_dtype=compute_dtype),
        grid=(bsz,),
        in_specs=[
            pl.BlockSpec((1, seq, model_dim), lambda b: (b, 0, 0)),       # attn+resid
            pl.BlockSpec((1, model_dim), lambda b: (0, 0)),               # ln2 gamma
            pl.BlockSpec((1, model_dim), lambda b: (0, 0)),               # ln2 beta
            pl.BlockSpec((model_dim, mlp_dim), lambda b: (0, 0)),         # W1
            pl.BlockSpec((1, mlp_dim), lambda b: (0, 0)),                 # b1
            pl.BlockSpec((mlp_dim, model_dim), lambda b: (0, 0)),         # W2
            pl.BlockSpec((1, model_dim), lambda b: (0, 0)),               # b2
        ],
        out_specs=pl.BlockSpec((1, seq, model_dim), lambda b: (b, 0, 0)),
        out_shape=jax.ShapeDtypeStruct((bsz, seq, model_dim), jnp.float32),
        compiler_params=pltpu.CompilerParams(dimension_semantics=("parallel",)),
    )
    out = mlp_call(resid1, g2, be2, w1, b1, w2, b2)
    return out, attn_probs


# ----------------------------------------------------------------------------
# Pure-JAX reference (mirrors the PyTorch block forward, eval-mode dropout)
# ----------------------------------------------------------------------------
def _reference(inputs, params, *, num_heads):
    bsz, seq, model_dim = inputs.shape
    hd = model_dim // num_heads

    def ln(x, g, b):
        mu = jnp.mean(x, -1, keepdims=True)
        var = jnp.mean(jnp.square(x - mu), -1, keepdims=True)
        return (x - mu) * jax.lax.rsqrt(var + _LN_EPS) * g + b

    x = ln(inputs, params["ln1_gamma"], params["ln1_beta"])
    xp = x @ params["w_in"] + params["b_in"]
    xh = xp.reshape(bsz, seq, num_heads, hd).transpose(0, 2, 1, 3)
    s = jnp.einsum("bhsd,hde->bhse", xh, params["attn_weight"])
    s = jnp.einsum("bhse,bhte->bhst", s, xh) / hd
    p = jax.nn.softmax(s, axis=-1)
    o = jnp.einsum("bhst,bhtd->bhsd", p, xh)
    o = o.transpose(0, 2, 1, 3).reshape(bsz, seq, model_dim)
    attn_out = o @ params["w_out"] + params["b_out"]
    x1 = attn_out + inputs
    y = ln(x1, params["ln2_gamma"], params["ln2_beta"])
    h = jax.nn.gelu(y @ params["w1"] + params["b1"], approximate=False)
    y2 = h @ params["w2"] + params["b2"]
    return y2 + x1, p


if __name__ == "__main__":
    bsz, seq, model_dim, num_heads, mlp_dim = 2, 8, 32, 4, 64
    head_dim = model_dim // num_heads

    key = jax.random.PRNGKey(0)
    ks = jax.random.split(key, 14)
    n = jax.random.normal
    x = n(ks[0], (bsz, seq, model_dim), jnp.float32)

    params = {
        # Linear weights stored as (in, out); equivalent to PyTorch W.T
        "ln1_gamma": 1.0 + 0.1 * n(ks[1], (model_dim,), jnp.float32),
        "ln1_beta": 0.1 * n(ks[2], (model_dim,), jnp.float32),
        "w_in": 0.1 * n(ks[3], (model_dim, model_dim), jnp.float32),
        "b_in": 0.1 * n(ks[4], (model_dim,), jnp.float32),
        "attn_weight": 0.02 * n(ks[5], (num_heads, head_dim, head_dim), jnp.float32),
        "w_out": 0.1 * n(ks[6], (model_dim, model_dim), jnp.float32),
        "b_out": 0.1 * n(ks[7], (model_dim,), jnp.float32),
        "ln2_gamma": 1.0 + 0.1 * n(ks[8], (model_dim,), jnp.float32),
        "ln2_beta": 0.1 * n(ks[9], (model_dim,), jnp.float32),
        "w1": 0.1 * n(ks[10], (model_dim, mlp_dim), jnp.float32),
        "b1": 0.1 * n(ks[11], (mlp_dim,), jnp.float32),
        "w2": 0.1 * n(ks[12], (mlp_dim, model_dim), jnp.float32),
        "b2": 0.1 * n(ks[13], (model_dim,), jnp.float32),
    }

    ref_out, ref_probs = _reference(x, params, num_heads=num_heads)

    # f32 compute path (strict check).
    out, probs = optimized_mhsa_block(x, params, num_heads=num_heads)
    out, probs = jax.block_until_ready((out, probs))
    assert out.shape == (bsz, seq, model_dim)
    assert probs.shape == (bsz, num_heads, seq, seq)
    assert jnp.allclose(probs, ref_probs, rtol=1e-4, atol=1e-4), (
        float(jnp.max(jnp.abs(probs - ref_probs))))
    assert jnp.allclose(out, ref_out, rtol=5e-4, atol=5e-4), (
        float(jnp.max(jnp.abs(out - ref_out))))

    # bf16 MXU-input path (f32 accumulation / softmax) — loose check.
    out_bf, probs_bf = optimized_mhsa_block(
        x, params, num_heads=num_heads, compute_dtype=jnp.bfloat16)
    out_bf, probs_bf = jax.block_until_ready((out_bf, probs_bf))
    assert jnp.allclose(probs_bf, ref_probs, rtol=5e-2, atol=5e-2), (
        float(jnp.max(jnp.abs(probs_bf - ref_probs))))
    assert jnp.allclose(out_bf, ref_out, rtol=5e-2, atol=5e-2), (
        float(jnp.max(jnp.abs(out_bf - ref_out))))

    print("KERNEL_OK")
</pallas_src>

<mosaic_0001>
module attributes {stable_mosaic.version = 11 : i64} {
  func.func @_mhsa_kernel(%arg0: i32, %arg1: i32, %arg2: memref<1x8x32xf32, #tpu.memory_space<vmem>>, %arg3: memref<1x32xf32, #tpu.memory_space<vmem>>, %arg4: memref<1x32xf32, #tpu.memory_space<vmem>>, %arg5: memref<1x32x32xf32, #tpu.memory_space<vmem>>, %arg6: memref<1x1x32xf32, #tpu.memory_space<vmem>>, %arg7: memref<1x32x32xf32, #tpu.memory_space<vmem>>, %arg8: memref<1x1x32xf32, #tpu.memory_space<vmem>>, %arg9: memref<1x32x32xf32, #tpu.memory_space<vmem>>, %arg10: memref<1x32xf32, #tpu.memory_space<vmem>>, %arg11: memref<1x8x32xf32, #tpu.memory_space<vmem>>, %arg12: memref<1x4x8x8xf32, #tpu.memory_space<vmem>>, %arg13: memref<8x32xf32, #tpu.memory_space<vmem>>, %arg14: memref<8x32xf32, #tpu.memory_space<vmem>>) attributes {dimension_semantics = [#tpu.dimension_semantics<parallel>, #tpu.dimension_semantics<arbitrary>], iteration_bounds = array<i64: 2, 1>, scalar_prefetch = 0 : i64, scratch_operands = 2 : i64, tpu.core_type = #tpu.core_type<tc>, window_params = [{transform_indices = @transform_0, window_bounds = array<i64: 1, 8, 32>}, {pipeline_mode = #tpu.pipeline_mode<synchronous>, transform_indices = @transform_1, window_bounds = array<i64: 1, 32>}, {pipeline_mode = #tpu.pipeline_mode<synchronous>, transform_indices = @transform_2, window_bounds = array<i64: 1, 32>}, {transform_indices = @transform_3, window_bounds = array<i64: 1, 32, 32>}, {transform_indices = @transform_4, window_bounds = array<i64: 1, 1, 32>}, {transform_indices = @transform_5, window_bounds = array<i64: 1, 32, 32>}, {transform_indices = @transform_6, window_bounds = array<i64: 1, 1, 32>}, {transform_indices = @transform_7, window_bounds = array<i64: 1, 32, 32>}, {pipeline_mode = #tpu.pipeline_mode<synchronous>, transform_indices = @transform_8, window_bounds = array<i64: 1, 32>}, {transform_indices = @transform_9, window_bounds = array<i64: 1, 8, 32>}, {transform_indices = @transform_10, window_bounds = array<i64: 1, 4, 8, 8>}]} {
    %c0_i32 = arith.constant 0 : i32
    %0 = arith.cmpi eq, %arg1, %c0_i32 : i32
    %1 = arith.extui %0 : i1 to i32
    %c0_i32_0 = arith.constant 0 : i32
    %2 = arith.cmpi ne, %1, %c0_i32_0 : i32
    scf.if %2 {
      %c0_55 = arith.constant 0 : index
      %c0_56 = arith.constant 0 : index
      %c0_57 = arith.constant 0 : index
      %98 = vector.load %arg2[%c0_55, %c0_56, %c0_57] : memref<1x8x32xf32, #tpu.memory_space<vmem>>, vector<1x8x32xf32>
      %99 = vector.shape_cast %98 : vector<1x8x32xf32> to vector<8x32xf32>
      %c0_58 = arith.constant 0 : index
      %c0_59 = arith.constant 0 : index
      %100 = vector.load %arg3[%c0_58, %c0_59] : memref<1x32xf32, #tpu.memory_space<vmem>>, vector<1x32xf32>
      %c0_60 = arith.constant 0 : index
      %c0_61 = arith.constant 0 : index
      %101 = vector.load %arg4[%c0_60, %c0_61] : memref<1x32xf32, #tpu.memory_space<vmem>>, vector<1x32xf32>
      %cst_62 = arith.constant dense<0.000000e+00> : vector<8xf32>
      %102 = vector.multi_reduction <add>, %99, %cst_62 [1] : vector<8x32xf32> to vector<8xf32>
      %103 = vector.shape_cast %102 : vector<8xf32> to vector<8x1xf32>
      %cst_63 = arith.constant 3.200000e+01 : f32
      %104 = vector.broadcast %cst_63 : f32 to vector<8x1xf32>
      %105 = arith.divf %103, %104 : vector<8x1xf32>
      %106 = vector.broadcast %105 : vector<8x1xf32> to vector<8x32xf32>
      %107 = arith.subf %99, %106 : vector<8x32xf32>
      %108 = arith.mulf %107, %107 : vector<8x32xf32>
      %cst_64 = arith.constant dense<0.000000e+00> : vector<8xf32>
      %109 = vector.multi_reduction <add>, %108, %cst_64 [1] : vector<8x32xf32> to vector<8xf32>
      %110 = vector.shape_cast %109 : vector<8xf32> to vector<8x1xf32>
      %cst_65 = arith.constant 3.200000e+01 : f32
      %111 = vector.broadcast %cst_65 : f32 to vector<8x1xf32>
      %112 = arith.divf %110, %111 : vector<8x1xf32>
      %113 = vector.broadcast %105 : vector<8x1xf32> to vector<8x32xf32>
      %114 = arith.subf %99, %113 : vector<8x32xf32>
      %cst_66 = arith.constant 9.99999974E-6 : f32
      %115 = vector.broadcast %cst_66 : f32 to vector<8x1xf32>
      %116 = arith.addf %112, %115 : vector<8x1xf32>
      %117 = math.rsqrt %116 : vector<8x1xf32>
      %118 = vector.broadcast %117 : vector<8x1xf32> to vector<8x32xf32>
      %119 = arith.mulf %114, %118 : vector<8x32xf32>
      %120 = vector.broadcast %100 : vector<1x32xf32> to vector<8x32xf32>
      %121 = arith.mulf %119, %120 : vector<8x32xf32>
      %122 = vector.broadcast %101 : vector<1x32xf32> to vector<8x32xf32>
      %123 = arith.addf %121, %122 : vector<8x32xf32>
      %c0_67 = arith.constant 0 : index
      %c0_68 = arith.constant 0 : index
      %124 = vector.load %arg13[%c0_67, %c0_68] : memref<8x32xf32, #tpu.memory_space<vmem>>, vector<8x32xf32>
      tpu.vector_store %arg13[%c0_67, %c0_68], %123 {strides = array<i32>} : memref<8x32xf32, #tpu.memory_space<vmem>>, vector<8x32xf32>,
      %cst_69 = arith.constant 0.000000e+00 : f32
      %125 = vector.broadcast %cst_69 : f32 to vector<8x32xf32>
      %c0_70 = arith.constant 0 : index
      %c0_71 = arith.constant 0 : index
      %126 = vector.load %arg14[%c0_70, %c0_71] : memref<8x32xf32, #tpu.memory_space<vmem>>, vector<8x32xf32>
      tpu.vector_store %arg14[%c0_70, %c0_71], %125 {strides = array<i32>} : memref<8x32xf32, #tpu.memory_space<vmem>>, vector<8x32xf32>,
    } else {
    }
    %c0 = arith.constant 0 : index
    %c0_1 = arith.constant 0 : index
    %3 = vector.load %arg13[%c0, %c0_1] : memref<8x32xf32, #tpu.memory_space<vmem>>, vector<8x32xf32>
    %c0_2 = arith.constant 0 : index
    %c0_3 = arith.constant 0 : index
    %c0_4 = arith.constant 0 : index
    %4 = vector.load %arg5[%c0_2, %c0_3, %c0_4] : memref<1x32x32xf32, #tpu.memory_space<vmem>>, vector<1x32x32xf32>
    %5 = vector.shape_cast %4 : vector<1x32x32xf32> to vector<32x32xf32>
    %cst = arith.constant dense<0.000000e+00> : vector<8x32xf32>
    %6 = tpu.matmul %3, %5, %cst {dimension_numbers = #tpu.dot_dimension_numbers<[1], [0], [0], [1], [0, 0, 1, 1], [], []>} : vector<8x32xf32>, vector<32x32xf32>, vector<8x32xf32> -> vector<8x32xf32>
    %c0_5 = arith.constant 0 : index
    %c0_6 = arith.constant 0 : index
    %c0_7 = arith.constant 0 : index
    %7 = vector.load %arg6[%c0_5, %c0_6, %c0_7] : memref<1x1x32xf32, #tpu.memory_space<vmem>>, vector<1x1x32xf32>
    %8 = vector.shape_cast %7 : vector<1x1x32xf32> to vector<1x32xf32>
    %9 = vector.broadcast %8 : vector<1x32xf32> to vector<8x32xf32>
    %10 = arith.addf %6, %9 : vector<8x32xf32>
    %c0_8 = arith.constant 0 : index
    %c0_9 = arith.constant 0 : index
    %c0_10 = arith.constant 0 : index
    %11 = vector.load %arg7[%c0_8, %c0_9, %c0_10] : memref<1x32x32xf32, #tpu.memory_space<vmem>>, vector<1x32x32xf32>
    %12 = vector.shape_cast %11 : vector<1x32x32xf32> to vector<32x32xf32>
    %cst_11 = arith.constant dense<0.000000e+00> : vector<8x32xf32>
    %13 = tpu.matmul %3, %12, %cst_11 {dimension_numbers = #tpu.dot_dimension_numbers<[1], [0], [0], [1], [0, 0, 1, 1], [], []>} : vector<8x32xf32>, vector<32x32xf32>, vector<8x32xf32> -> vector<8x32xf32>
    %c0_12 = arith.constant 0 : index
    %c0_13 = arith.constant 0 : index
    %c0_14 = arith.constant 0 : index
    %14 = vector.load %arg8[%c0_12, %c0_13, %c0_14] : memref<1x1x32xf32, #tpu.memory_space<vmem>>, vector<1x1x32xf32>
    %15 = vector.shape_cast %14 : vector<1x1x32xf32> to vector<1x32xf32>
    %16 = vector.broadcast %15 : vector<1x32xf32> to vector<8x32xf32>
    %17 = arith.addf %13, %16 : vector<8x32xf32>
    %cst_15 = arith.constant 1.250000e-01 : f32
    %18 = vector.broadcast %cst_15 : f32 to vector<8x32xf32>
    %19 = arith.mulf %17, %18 : vector<8x32xf32>
    %20 = vector.extract_strided_slice %10 {offsets = [0, 0], sizes = [8, 8], strides = [1, 1]} : vector<8x32xf32> to vector<8x8xf32>
    %21 = vector.extract_strided_slice %19 {offsets = [0, 0], sizes = [8, 8], strides = [1, 1]} : vector<8x32xf32> to vector<8x8xf32>
    %cst_16 = arith.constant dense<0.000000e+00> : vector<8x8xf32>
    %22 = tpu.matmul %21, %20, %cst_16 {dimension_numbers = #tpu.dot_dimension_numbers<[1], [1], [0], [0], [0, 0, 1, 0], [], []>} : vector<8x8xf32>, vector<8x8xf32>, vector<8x8xf32> -> vector<8x8xf32>
    %cst_17 = arith.constant dense<0xFF800000> : vector<8xf32>
    %23 = vector.multi_reduction <maximumf>, %22, %cst_17 [1] : vector<8x8xf32> to vector<8xf32>
    %24 = vector.shape_cast %23 : vector<8xf32> to vector<8x1xf32>
    %25 = vector.broadcast %24 : vector<8x1xf32> to vector<8x8xf32>
    %26 = arith.subf %22, %25 : vector<8x8xf32>
    %27 = math.exp %26 : vector<8x8xf32>
    %cst_18 = arith.constant dense<0.000000e+00> : vector<8xf32>
    %28 = vector.multi_reduction <add>, %27, %cst_18 [1] : vector<8x8xf32> to vector<8xf32>
    %29 = vector.shape_cast %28 : vector<8xf32> to vector<8x1xf32>
    %30 = tpu.reciprocal %29 : vector<8x1xf32> -> vector<8x1xf32>
    %31 = vector.broadcast %30 : vector<8x1xf32> to vector<8x8xf32>
    %32 = arith.mulf %27, %31 : vector<8x8xf32>
    %c0_19 = arith.constant 0 : index
    %c0_20 = arith.constant 0 : index
    %c0_21 = arith.constant 0 : index
    %c0_22 = arith.constant 0 : index
    %33 = vector.load %arg12[%c0_19, %c0_20, %c0_21, %c0_22] : memref<1x4x8x8xf32, #tpu.memory_space<vmem>>, vector<1x1x8x8xf32>
    %34 = vector.shape_cast %33 : vector<1x1x8x8xf32> to vector<8x8xf32>
    %35 = vector.shape_cast %32 : vector<8x8xf32> to vector<1x1x8x8xf32>
    tpu.vector_store %arg12[%c0_19, %c0_20, %c0_21, %c0_22], %35 {strides = array<i32>} : memref<1x4x8x8xf32, #tpu.memory_space<vmem>>, vector<1x1x8x8xf32>,
    %cst_23 = arith.constant dense<0.000000e+00> : vector<8x8xf32>
    %36 = tpu.matmul %32, %20, %cst_23 {dimension_numbers = #tpu.dot_dimension_numbers<[1], [0], [0], [1], [0, 0, 1, 1], [], []>} : vector<8x8xf32>, vector<8x8xf32>, vector<8x8xf32> -> vector<8x8xf32>
    %37 = vector.extract_strided_slice %10 {offsets = [0, 8], sizes = [8, 8], strides = [1, 1]} : vector<8x32xf32> to vector<8x8xf32>
    %38 = vector.extract_strided_slice %19 {offsets = [0, 8], sizes = [8, 8], strides = [1, 1]} : vector<8x32xf32> to vector<8x8xf32>
    %cst_24 = arith.constant dense<0.000000e+00> : vector<8x8xf32>
    %39 = tpu.matmul %38, %37, %cst_24 {dimension_numbers = #tpu.dot_dimension_numbers<[1], [1], [0], [0], [0, 0, 1, 0], [], []>} : vector<8x8xf32>, vector<8x8xf32>, vector<8x8xf32> -> vector<8x8xf32>
    %cst_25 = arith.constant dense<0xFF800000> : vector<8xf32>
    %40 = vector.multi_reduction <maximumf>, %39, %cst_25 [1] : vector<8x8xf32> to vector<8xf32>
    %41 = vector.shape_cast %40 : vector<8xf32> to vector<8x1xf32>
    %42 = vector.broadcast %41 : vector<8x1xf32> to vector<8x8xf32>
    %43 = arith.subf %39, %42 : vector<8x8xf32>
    %44 = math.exp %43 : vector<8x8xf32>
    %cst_26 = arith.constant dense<0.000000e+00> : vector<8xf32>
    %45 = vector.multi_reduction <add>, %44, %cst_26 [1] : vector<8x8xf32> to vector<8xf32>
    %46 = vector.shape_cast %45 : vector<8xf32> to vector<8x1xf32>
    %47 = tpu.reciprocal %46 : vector<8x1xf32> -> vector<8x1xf32>
    %48 = vector.broadcast %47 : vector<8x1xf32> to vector<8x8xf32>
    %49 = arith.mulf %44, %48 : vector<8x8xf32>
    %c0_27 = arith.constant 0 : index
    %c1 = arith.constant 1 : index
    %c0_28 = arith.constant 0 : index
    %c0_29 = arith.constant 0 : index
    %50 = vector.load %arg12[%c0_27, %c1, %c0_28, %c0_29] : memref<1x4x8x8xf32, #tpu.memory_space<vmem>>, vector<1x1x8x8xf32>
    %51 = vector.shape_cast %50 : vector<1x1x8x8xf32> to vector<8x8xf32>
    %52 = vector.shape_cast %49 : vector<8x8xf32> to vector<1x1x8x8xf32>
    tpu.vector_store %arg12[%c0_27, %c1, %c0_28, %c0_29], %52 {strides = array<i32>} : memref<1x4x8x8xf32, #tpu.memory_space<vmem>>, vector<1x1x8x8xf32>,
    %cst_30 = arith.constant dense<0.000000e+00> : vector<8x8xf32>
    %53 = tpu.matmul %49, %37, %cst_30 {dimension_numbers = #tpu.dot_dimension_numbers<[1], [0], [0], [1], [0, 0, 1, 1], [], []>} : vector<8x8xf32>, vector<8x8xf32>, vector<8x8xf32> -> vector<8x8xf32>
    %54 = vector.extract_strided_slice %10 {offsets = [0, 16], sizes = [8, 8], strides = [1, 1]} : vector<8x32xf32> to vector<8x8xf32>
    %55 = vector.extract_strided_slice %19 {offsets = [0, 16], sizes = [8, 8], strides = [1, 1]} : vector<8x32xf32> to vector<8x8xf32>
    %cst_31 = arith.constant dense<0.000000e+00> : vector<8x8xf32>
    %56 = tpu.matmul %55, %54, %cst_31 {dimension_numbers = #tpu.dot_dimension_numbers<[1], [1], [0], [0], [0, 0, 1, 0], [], []>} : vector<8x8xf32>, vector<8x8xf32>, vector<8x8xf32> -> vector<8x8xf32>
    %cst_32 = arith.constant dense<0xFF800000> : vector<8xf32>
    %57 = vector.multi_reduction <maximumf>, %56, %cst_32 [1] : vector<8x8xf32> to vector<8xf32>
    %58 = vector.shape_cast %57 : vector<8xf32> to vector<8x1xf32>
    %59 = vector.broadcast %58 : vector<8x1xf32> to vector<8x8xf32>
    %60 = arith.subf %56, %59 : vector<8x8xf32>
    %61 = math.exp %60 : vector<8x8xf32>
    %cst_33 = arith.constant dense<0.000000e+00> : vector<8xf32>
    %62 = vector.multi_reduction <add>, %61, %cst_33 [1] : vector<8x8xf32> to vector<8xf32>
    %63 = vector.shape_cast %62 : vector<8xf32> to vector<8x1xf32>
    %64 = tpu.reciprocal %63 : vector<8x1xf32> -> vector<8x1xf32>
    %65 = vector.broadcast %64 : vector<8x1xf32> to vector<8x8xf32>
    %66 = arith.mulf %61, %65 : vector<8x8xf32>
    %c0_34 = arith.constant 0 : index
    %c2 = arith.constant 2 : index
    %c0_35 = arith.constant 0 : index
    %c0_36 = arith.constant 0 : index
    %67 = vector.load %arg12[%c0_34, %c2, %c0_35, %c0_36] : memref<1x4x8x8xf32, #tpu.memory_space<vmem>>, vector<1x1x8x8xf32>
    %68 = vector.shape_cast %67 : vector<1x1x8x8xf32> to vector<8x8xf32>
    %69 = vector.shape_cast %66 : vector<8x8xf32> to vector<1x1x8x8xf32>
    tpu.vector_store %arg12[%c0_34, %c2, %c0_35, %c0_36], %69 {strides = array<i32>} : memref<1x4x8x8xf32, #tpu.memory_space<vmem>>, vector<1x1x8x8xf32>,
    %cst_37 = arith.constant dense<0.000000e+00> : vector<8x8xf32>
    %70 = tpu.matmul %66, %54, %cst_37 {dimension_numbers = #tpu.dot_dimension_numbers<[1], [0], [0], [1], [0, 0, 1, 1], [], []>} : vector<8x8xf32>, vector<8x8xf32>, vector<8x8xf32> -> vector<8x8xf32>
    %71 = vector.extract_strided_slice %10 {offsets = [0, 24], sizes = [8, 8], strides = [1, 1]} : vector<8x32xf32> to vector<8x8xf32>
    %72 = vector.extract_strided_slice %19 {offsets = [0, 24], sizes = [8, 8], strides = [1, 1]} : vector<8x32xf32> to vector<8x8xf32>
    %cst_38 = arith.constant dense<0.000000e+00> : vector<8x8xf32>
    %73 = tpu.matmul %72, %71, %cst_38 {dimension_numbers = #tpu.dot_dimension_numbers<[1], [1], [0], [0], [0, 0, 1, 0], [], []>} : vector<8x8xf32>, vector<8x8xf32>, vector<8x8xf32> -> vector<8x8xf32>
    %cst_39 = arith.constant dense<0xFF800000> : vector<8xf32>
    %74 = vector.multi_reduction <maximumf>, %73, %cst_39 [1] : vector<8x8xf32> to vector<8xf32>
    %75 = vector.shape_cast %74 : vector<8xf32> to vector<8x1xf32>
    %76 = vector.broadcast %75 : vector<8x1xf32> to vector<8x8xf32>
    %77 = arith.subf %73, %76 : vector<8x8xf32>
    %78 = math.exp %77 : vector<8x8xf32>
    %cst_40 = arith.constant dense<0.000000e+00> : vector<8xf32>
    %79 = vector.multi_reduction <add>, %78, %cst_40 [1] : vector<8x8xf32> to vector<8xf32>
    %80 = vector.shape_cast %79 : vector<8xf32> to vector<8x1xf32>
    %81 = tpu.reciprocal %80 : vector<8x1xf32> -> vector<8x1xf32>
    %82 = vector.broadcast %81 : vector<8x1xf32> to vector<8x8xf32>
    %83 = arith.mulf %78, %82 : vector<8x8xf32>
    %c0_41 = arith.constant 0 : index
    %c3 = arith.constant 3 : index
    %c0_42 = arith.constant 0 : index
    %c0_43 = arith.constant 0 : index
    %84 = vector.load %arg12[%c0_41, %c3, %c0_42, %c0_43] : memref<1x4x8x8xf32, #tpu.memory_space<vmem>>, vector<1x1x8x8xf32>
    %85 = vector.shape_cast %84 : vector<1x1x8x8xf32> to vector<8x8xf32>
    %86 = vector.shape_cast %83 : vector<8x8xf32> to vector<1x1x8x8xf32>
    tpu.vector_store %arg12[%c0_41, %c3, %c0_42, %c0_43], %86 {strides = array<i32>} : memref<1x4x8x8xf32, #tpu.memory_space<vmem>>, vector<1x1x8x8xf32>,
    %cst_44 = arith.constant dense<0.000000e+00> : vector<8x8xf32>
    %87 = tpu.matmul %83, %71, %cst_44 {dimension_numbers = #tpu.dot_dimension_numbers<[1], [0], [0], [1], [0, 0, 1, 1], [], []>} : vector<8x8xf32>, vector<8x8xf32>, vector<8x8xf32> -> vector<8x8xf32>
    %88 = tpu.concatenate %36, %53, %70, %87 in 1 : vector<8x8xf32>, vector<8x8xf32>, vector<8x8xf32>, vector<8x8xf32> -> vector<8x32xf32>
    %c0_45 = arith.constant 0 : index
    %c0_46 = arith.constant 0 : index
    %89 = vector.load %arg14[%c0_45, %c0_46] : memref<8x32xf32, #tpu.memory_space<vmem>>, vector<8x32xf32>
    %c0_47 = arith.constant 0 : index
    %c0_48 = arith.constant 0 : index
    %c0_49 = arith.constant 0 : index
    %90 = vector.load %arg9[%c0_47, %c0_48, %c0_49] : memref<1x32x32xf32, #tpu.memory_space<vmem>>, vector<1x32x32xf32>
    %91 = vector.shape_cast %90 : vector<1x32x32xf32> to vector<32x32xf32>
    %cst_50 = arith.constant dense<0.000000e+00> : vector<8x32xf32>
    %92 = tpu.matmul %88, %91, %cst_50 {dimension_numbers = #tpu.dot_dimension_numbers<[1], [0], [0], [1], [0, 0, 1, 1], [], []>} : vector<8x32xf32>, vector<32x32xf32>, vector<8x32xf32> -> vector<8x32xf32>
    %93 = arith.addf %89, %92 : vector<8x32xf32>
    %c0_51 = arith.constant 0 : index
    %c0_52 = arith.constant 0 : index
    %94 = vector.load %arg14[%c0_51, %c0_52] : memref<8x32xf32, #tpu.memory_space<vmem>>, vector<8x32xf32>
    tpu.vector_store %arg14[%c0_51, %c0_52], %93 {strides = array<i32>} : memref<8x32xf32, #tpu.memory_space<vmem>>, vector<8x32xf32>,
    %c0_i32_53 = arith.constant 0 : i32
    %95 = arith.cmpi eq, %arg1, %c0_i32_53 : i32
    %96 = arith.extui %95 : i1 to i32
    %c0_i32_54 = arith.constant 0 : i32
    %97 = arith.cmpi ne, %96, %c0_i32_54 : i32
    scf.if %97 {
      %c0_55 = arith.constant 0 : index
      %c0_56 = arith.constant 0 : index
      %98 = vector.load %arg14[%c0_55, %c0_56] : memref<8x32xf32, #tpu.memory_space<vmem>>, vector<8x32xf32>
      %c0_57 = arith.constant 0 : index
      %c0_58 = arith.constant 0 : index
      %99 = vector.load %arg10[%c0_57, %c0_58] : memref<1x32xf32, #tpu.memory_space<vmem>>, vector<1x32xf32>
      %100 = vector.broadcast %99 : vector<1x32xf32> to vector<8x32xf32>
      %101 = arith.addf %98, %100 : vector<8x32xf32>
      %c0_59 = arith.constant 0 : index
      %c0_60 = arith.constant 0 : index
      %c0_61 = arith.constant 0 : index
      %102 = vector.load %arg2[%c0_59, %c0_60, %c0_61] : memref<1x8x32xf32, #tpu.memory_space<vmem>>, vector<1x8x32xf32>
      %103 = vector.shape_cast %102 : vector<1x8x32xf32> to vector<8x32xf32>
      %104 = arith.addf %101, %103 : vector<8x32xf32>
      %c0_62 = arith.constant 0 : index
      %c0_63 = arith.constant 0 : index
      %c0_64 = arith.constant 0 : index
      %105 = vector.load %arg11[%c0_62, %c0_63, %c0_64] : memref<1x8x32xf32, #tpu.memory_space<vmem>>, vector<1x8x32xf32>
      %106 = vector.shape_cast %105 : vector<1x8x32xf32> to vector<8x32xf32>
      %107 = vector.shape_cast %104 : vector<8x32xf32> to vector<1x8x32xf32>
      tpu.vector_store %arg11[%c0_62, %c0_63, %c0_64], %107 {strides = array<i32>} : memref<1x8x32xf32, #tpu.memory_space<vmem>>, vector<1x8x32xf32>,
    } else {
    }
    return
  }
  func.func @transform_0(%arg0: i32, %arg1: i32) -> (i32, i32, i32) {
    %c0_i32 = arith.constant 0 : i32
    %c0_i32_0 = arith.constant 0 : i32
    %c0_i32_1 = arith.constant 0 : i32
    return %arg0, %c0_i32, %c0_i32_0 : i32, i32, i32
  }
  func.func @transform_1(%arg0: i32, %arg1: i32) -> (i32, i32) {
    %c0_i32 = arith.constant 0 : i32
    %c0_i32_0 = arith.constant 0 : i32
    %c0_i32_1 = arith.constant 0 : i32
    return %c0_i32, %c0_i32_0 : i32, i32
  }
  func.func @transform_2(%arg0: i32, %arg1: i32) -> (i32, i32) {
    %c0_i32 = arith.constant 0 : i32
    %c0_i32_0 = arith.constant 0 : i32
    %c0_i32_1 = arith.constant 0 : i32
    return %c0_i32, %c0_i32_0 : i32, i32
  }
  func.func @transform_3(%arg0: i32, %arg1: i32) -> (i32, i32, i32) {
    %c0_i32 = arith.constant 0 : i32
    %c0_i32_0 = arith.constant 0 : i32
    %c0_i32_1 = arith.constant 0 : i32
    return %arg1, %c0_i32, %c0_i32_0 : i32, i32, i32
  }
  func.func @transform_4(%arg0: i32, %arg1: i32) -> (i32, i32, i32) {
    %c0_i32 = arith.constant 0 : i32
    %c0_i32_0 = arith.constant 0 : i32
    %c0_i32_1 = arith.constant 0 : i32
    return %arg1, %c0_i32, %c0_i32_0 : i32, i32, i32
  }
  func.func @transform_5(%arg0: i32, %arg1: i32) -> (i32, i32, i32) {
    %c0_i32 = arith.constant 0 : i32
    %c0_i32_0 = arith.constant 0 : i32
    %c0_i32_1 = arith.constant 0 : i32
    return %arg1, %c0_i32, %c0_i32_0 : i32, i32, i32
  }
  func.func @transform_6(%arg0: i32, %arg1: i32) -> (i32, i32, i32) {
    %c0_i32 = arith.constant 0 : i32
    %c0_i32_0 = arith.constant 0 : i32
    %c0_i32_1 = arith.constant 0 : i32
    return %arg1, %c0_i32, %c0_i32_0 : i32, i32, i32
  }
  func.func @transform_7(%arg0: i32, %arg1: i32) -> (i32, i32, i32) {
    %c0_i32 = arith.constant 0 : i32
    %c0_i32_0 = arith.constant 0 : i32
    %c0_i32_1 = arith.constant 0 : i32
    return %arg1, %c0_i32, %c0_i32_0 : i32, i32, i32
  }
  func.func @transform_8(%arg0: i32, %arg1: i32) -> (i32, i32) {
    %c0_i32 = arith.constant 0 : i32
    %c0_i32_0 = arith.constant 0 : i32
    %c0_i32_1 = arith.constant 0 : i32
    return %c0_i32, %c0_i32_0 : i32, i32
  }
  func.func @transform_9(%arg0: i32, %arg1: i32) -> (i32, i32, i32) {
    %c0_i32 = arith.constant 0 : i32
    %c0_i32_0 = arith.constant 0 : i32
    %c0_i32_1 = arith.constant 0 : i32
    return %arg0, %c0_i32, %c0_i32_0 : i32, i32, i32
  }
  func.func @transform_10(%arg0: i32, %arg1: i32) -> (i32, i32, i32, i32) {
    %c0_i32 = arith.constant 0 : i32
    %c0_i32_0 = arith.constant 0 : i32
    %c0_i32_1 = arith.constant 0 : i32
    return %arg0, %arg1, %c0_i32, %c0_i32_0 : i32, i32, i32, i32
  }
}

</mosaic_0001>

<llo_original>
// kernel: tpu_custom_call.1
$region0: #{tpu_custom_call.1}
  #allocation0 [shape = 'u32[]', space=smem, size = 0x4, offset = 0x4, fixed_abs, tag = 'smem constant byte address 0x4 - core index']
  #allocation1 [shape = 'u32[144,128]{1,0:T(1,128)}', space=vmem, size = 0x12000, scoped, tag = 'internal scratch']
  #allocation2 [shape = 'f32[8,32]{1,0:T(8,128)}', space=vmem, size = 0x1000, scoped, tag = 'scratch operand']
  #allocation3 [shape = 'f32[8,32]{1,0:T(8,128)}', space=vmem, size = 0x1000, scoped, tag = 'scratch operand']
  %s0 = inlined_call_operand.hbm [shape: f32[2,8,32], index: 0, kind: input, shape index: {}]
  %s1 = inlined_call_operand.vmem [shape: f32[1,32], index: 1, kind: input, shape index: {}]
  %s2 = inlined_call_operand.vmem [shape: f32[1,32], index: 2, kind: input, shape index: {}]
  %s3 = inlined_call_operand.hbm [shape: f32[1,32,32], index: 3, kind: input, shape index: {}]
  %s4 = inlined_call_operand.vmem [shape: f32[1,1,32], index: 4, kind: input, shape index: {}]
  %s5 = inlined_call_operand.hbm [shape: f32[1,32,32], index: 5, kind: input, shape index: {}]
  %s6 = inlined_call_operand.vmem [shape: f32[1,1,32], index: 6, kind: input, shape index: {}]
  %s7 = inlined_call_operand.hbm [shape: f32[1,32,32], index: 7, kind: input, shape index: {}]
  %s8 = inlined_call_operand.vmem [shape: f32[1,32], index: 8, kind: input, shape index: {}]
  %s9 = inlined_call_operand.hbm [shape: f32[2,8,32], index: 9, kind: output, shape index: {0}]
  %s10 = inlined_call_operand.hbm [shape: f32[2,4,8,8], index: 10, kind: output, shape index: {1}]
  %11 = xla_tuple %s9, %s10
  %s12 = sld [smem:[#allocation0]]
  $region101: #{tpu_custom_call.1} parent=0
    _
  %s14 = ssub.s32 1, %s12
  %s15 = scalar_select 0, %s14, %s12
  $region1: #{tpu_custom_call.1} parent=0
    #allocation4 [shape = 'u8[8192]{0}', space=vmem, size = 0x2000, scoped, tag = 'input window, operand 0']
    #allocation5 [shape = 's32[2]{0}', space=sflag, size = 0x8, scoped, tag = 'scoped memory for tpu_custom_call.1']
    #allocation6 [shape = 's32[2]{0}', space=sflag, size = 0x8, scoped, tag = 'scoped memory for tpu_custom_call.1']
    #allocation7 [shape = 'u8[16384]{0}', space=vmem, size = 0x4000, scoped, tag = 'input window, operand 3, single buffered']
    #allocation8 [shape = 's32[1]{0}', space=sflag, size = 0x4, scoped, tag = 'scoped memory for tpu_custom_call.1']
    #allocation9 [shape = 'u8[16384]{0}', space=vmem, size = 0x4000, scoped, tag = 'input window, operand 5, single buffered']
    #allocation10 [shape = 'u8[16384]{0}', space=vmem, size = 0x4000, scoped, tag = 'input window, operand 7, single buffered']
    #allocation11 [shape = 's32[1]{0}', space=sflag, size = 0x4, scoped, tag = 'scoped memory for tpu_custom_call.1']
    #allocation12 [shape = 'u8[8192]{0}', space=vmem, size = 0x2000, scoped, tag = 'output window, operand 0']
    #allocation13 [shape = 'u8[32768]{0}', space=vmem, size = 0x8000, scoped, tag = 'output window, operand 1']
    #allocation14 [shape = 's32[2]{0}', space=sflag, size = 0x8, scoped, tag = 'scoped memory for tpu_custom_call.1']
    %16 = vsyncpa [#allocation5], 0
    %s17 = scalar_lea.sflag [#allocation5], 1
    %18 = vsyncpa %s17, 0
    %19 = vsyncpa [#allocation8], 0
    %20 = vsyncpa [#allocation11], 0
    %21 = vsyncpa [#allocation6], 0
    %s22 = scalar_lea.sflag [#allocation6], 1
    %23 = vsyncpa %s22, 0
    %24 = vsyncpa [#allocation14], 0
    %s25 = scalar_lea.sflag [#allocation14], 1
    %26 = vsyncpa %s25, 0
    loop: start=0, step=1, limit=4
    $region2: #{tpu_custom_call.1} parent=1 // loop_pre_header
      _
    $region3: #{tpu_custom_call.1} parent=1 // loop_header
      %s28 = sphi 0, %s32
      %p29 = scmp.ge.s32.totalorder %s28, 4
      %s35 = sphi 0, %s47
      %s36 = sphi 0, %s43
      %s37 = sphi 0, %s35
      %s38 = sphi 0, %s36
      %s39 = sphi 0, %s37
      %s40 = sphi 0, %s38
      %s50 = sphi 0, %s52
      %s53 = sphi 0, %s50
      %s54 = sphi 0, %s53
      %s70 = sphi 0, %s54
      %s74 = sphi 0, %s74
      %s76 = sphi 0, %s74
      %s77 = sphi 0, %s76
      %s91 = sphi 0, %s77
      %s95 = sphi 0, %s95
      %s97 = sphi 0, %s95
      %s98 = sphi 0, %s97
      %s112 = sphi 0, %s98
      %s118 = sphi 0, %s120
      %s121 = sphi 0, %s118
      %s122 = sphi 0, %s121
      %s138 = sphi 0, %s122
      %s144 = sphi 0, %s146
      %s147 = sphi 0, %s144
      %s148 = sphi 0, %s147
      %s164 = sphi 0, %s148
      %s170 = sphi 0, %s172
      %s173 = sphi 0, %s170
      %s174 = sphi 0, %s173
      %s190 = sphi 0, %s174
      %s196 = sphi 0, %s198
      %s199 = sphi 0, %s196
      %s200 = sphi 0, %s199
      %s216 = sphi 0, %s200
      %s222 = sphi 0, %s224
      %s225 = sphi 0, %s222
      %s226 = sphi 0, %s225
      %s242 = sphi 0, %s226
      %s246 = sphi 0, %s246
      %s248 = sphi 0, %s246
      %s249 = sphi 0, %s248
      %s263 = sphi 0, %s249
      %s269 = sphi 0, %s271
      %s272 = sphi 0, %s269
      %s273 = sphi 0, %s272
      %s289 = sphi 0, %s273
      %s297 = sphi 0, %s299
      %s300 = sphi 0, %s297
      %s301 = sphi 0, %s300
      %s317 = sphi 0, %s301
    $region4: #{tpu_custom_call.1} parent=1 // loop_header_branch
      %31 = sbr.rel (%p29) target = $region8
    $region5: #{tpu_custom_call.1} parent=1 // loop_body
      %s33 = ssub.s32 %s28, 1
      %s34 = ssub.s32 %s28, 2
      %s41 = sadd.s32 1, %s36
      %p42 = scmp.ge.s32.totalorder %s41, 1
      %s43 = scalar_select %p42, 0, %s41
      %s44 = sadd.s32 1, %s35
      %s45 = scalar_select %p42, %s44, %s35
      %p46 = scmp.ge.s32.totalorder %s45, 2
      %s47 = scalar_select %p46, 0, %s45
      %s48 = ssub.s32 %s35, %s47
      %p49 = scmp.eq.s32.totalorder %s48, 0
      %s51 = sadd.s32 %s50, 1
      %s52 = scalar_select %p49, %s50, %s51
      %p55 = pneg %p49
      %p56 = scmp.eq.s32.totalorder %s28, 1
      %p57 = por %p55, %p56
      %p58 = scmp.ne.s32.totalorder %s50, %s53
      %p59 = scmp.eq.s32.totalorder %s28, 0
      %p60 = por %p58, %p59
      %p61 = scmp.ne.s32.totalorder %s50, %s53
      %p62 = scmp.eq.s32.totalorder %s33, 1
      %p63 = por %p61, %p62
      %p64 = scmp.ne.s32.totalorder %s53, %s54
      %p65 = scmp.eq.s32.totalorder %s33, 0
      %p66 = por %p64, %p65
      %p67 = scmp.ne.s32.totalorder %s53, %s54
      %p68 = scmp.eq.s32.totalorder %s34, 1
      %p69 = por %p67, %p68
      %p71 = scmp.ne.s32.totalorder %s54, %s70
      %p72 = scmp.eq.s32.totalorder %s34, 0
      %p73 = por %p71, %p72
      %s75 = sadd.s32 %s74, 1
      %p78 = scmp.eq.s32.totalorder %s28, 1
      %p79 = scmp.ne.s32.totalorder %s74, %s76
      %p80 = scmp.eq.s32.totalorder %s28, 0
      %p81 = por %p79, %p80
      %p82 = scmp.ne.s32.totalorder %s74, %s76
      %p83 = scmp.eq.s32.totalorder %s33, 1
      %p84 = por %p82, %p83
      %p85 = scmp.ne.s32.totalorder %s76, %s77
      %p86 = scmp.eq.s32.totalorder %s33, 0
      %p87 = por %p85, %p86
      %p88 = scmp.ne.s32.totalorder %s76, %s77
      %p89 = scmp.eq.s32.totalorder %s34, 1
      %p90 = por %p88, %p89
      %p92 = scmp.ne.s32.totalorder %s77, %s91
      %p93 = scmp.eq.s32.totalorder %s34, 0
      %p94 = por %p92, %p93
      %s96 = sadd.s32 %s95, 1
      %p99 = scmp.eq.s32.totalorder %s28, 1
      %p100 = scmp.ne.s32.totalorder %s95, %s97
      %p101 = scmp.eq.s32.totalorder %s28, 0
      %p102 = por %p100, %p101
      %p103 = scmp.ne.s32.totalorder %s95, %s97
      %p104 = scmp.eq.s32.totalorder %s33, 1
      %p105 = por %p103, %p104
      %p106 = scmp.ne.s32.totalorder %s97, %s98
      %p107 = scmp.eq.s32.totalorder %s33, 0
      %p108 = por %p106, %p107
      %p109 = scmp.ne.s32.totalorder %s97, %s98
      %p110 = scmp.eq.s32.totalorder %s34, 1
      %p111 = por %p109, %p110
      %p113 = scmp.ne.s32.totalorder %s98, %s112
      %p114 = scmp.eq.s32.totalorder %s34, 0
      %p115 = por %p113, %p114
      %s116 = ssub.s32 %s36, %s43
      %p117 = scmp.eq.s32.totalorder %s116, 0
      %s119 = sadd.s32 %s118, 1
      %s120 = scalar_select %p117, %s118, %s119
      %p123 = pneg %p117
      %p124 = scmp.eq.s32.totalorder %s28, 1
      %p125 = por %p123, %p124
      %p126 = scmp.ne.s32.totalorder %s118, %s121
      %p127 = scmp.eq.s32.totalorder %s28, 0
      %p128 = por %p126, %p127
      %p129 = scmp.ne.s32.totalorder %s118, %s121
      %p130 = scmp.eq.s32.totalorder %s33, 1
      %p131 = por %p129, %p130
      %p132 = scmp.ne.s32.totalorder %s121, %s122
      %p133 = scmp.eq.s32.totalorder %s33, 0
      %p134 = por %p132, %p133
      %p135 = scmp.ne.s32.totalorder %s121, %s122
      %p136 = scmp.eq.s32.totalorder %s34, 1
      %p137 = por %p135, %p136
      %p139 = scmp.ne.s32.totalorder %s122, %s138
      %p140 = scmp.eq.s32.totalorder %s34, 0
      %p141 = por %p139, %p140
      %s142 = ssub.s32 %s36, %s43
      %p143 = scmp.eq.s32.totalorder %s142, 0
      %s145 = sadd.s32 %s144, 1
      %s146 = scalar_select %p143, %s144, %s145
      %p149 = pneg %p143
      %p150 = scmp.eq.s32.totalorder %s28, 1
      %p151 = por %p149, %p150
      %p152 = scmp.ne.s32.totalorder %s144, %s147
      %p153 = scmp.eq.s32.totalorder %s28, 0
      %p154 = por %p152, %p153
      %p155 = scmp.ne.s32.totalorder %s144, %s147
      %p156 = scmp.eq.s32.totalorder %s33, 1
      %p157 = por %p155, %p156
      %p158 = scmp.ne.s32.totalorder %s147, %s148
      %p159 = scmp.eq.s32.totalorder %s33, 0
      %p160 = por %p158, %p159
      %p161 = scmp.ne.s32.totalorder %s147, %s148
      %p162 = scmp.eq.s32.totalorder %s34, 1
      %p163 = por %p161, %p162
      %p165 = scmp.ne.s32.totalorder %s148, %s164
      %p166 = scmp.eq.s32.totalorder %s34, 0
      %p167 = por %p165, %p166
      %s168 = ssub.s32 %s36, %s43
      %p169 = scmp.eq.s32.totalorder %s168, 0
      %s171 = sadd.s32 %s170, 1
      %s172 = scalar_select %p169, %s170, %s171
      %p175 = pneg %p169
      %p176 = scmp.eq.s32.totalorder %s28, 1
      %p177 = por %p175, %p176
      %p178 = scmp.ne.s32.totalorder %s170, %s173
      %p179 = scmp.eq.s32.totalorder %s28, 0
      %p180 = por %p178, %p179
      %p181 = scmp.ne.s32.totalorder %s170, %s173
      %p182 = scmp.eq.s32.totalorder %s33, 1
      %p183 = por %p181, %p182
      %p184 = scmp.ne.s32.totalorder %s173, %s174
      %p185 = scmp.eq.s32.totalorder %s33, 0
      %p186 = por %p184, %p185
      %p187 = scmp.ne.s32.totalorder %s173, %s174
      %p188 = scmp.eq.s32.totalorder %s34, 1
      %p189 = por %p187, %p188
      %p191 = scmp.ne.s32.totalorder %s174, %s190
      %p192 = scmp.eq.s32.totalorder %s34, 0
      %p193 = por %p191, %p192
      %s194 = ssub.s32 %s36, %s43
      %p195 = scmp.eq.s32.totalorder %s194, 0
      %s197 = sadd.s32 %s196, 1
      %s198 = scalar_select %p195, %s196, %s197
      %p201 = pneg %p195
      %p202 = scmp.eq.s32.totalorder %s28, 1
      %p203 = por %p201, %p202
      %p204 = scmp.ne.s32.totalorder %s196, %s199
      %p205 = scmp.eq.s32.totalorder %s28, 0
      %p206 = por %p204, %p205
      %p207 = scmp.ne.s32.totalorder %s196, %s199
      %p208 = scmp.eq.s32.totalorder %s33, 1
      %p209 = por %p207, %p208
      %p210 = scmp.ne.s32.totalorder %s199, %s200
      %p211 = scmp.eq.s32.totalorder %s33, 0
      %p212 = por %p210, %p211
      %p213 = scmp.ne.s32.totalorder %s199, %s200
      %p214 = scmp.eq.s32.totalorder %s34, 1
      %p215 = por %p213, %p214
      %p217 = scmp.ne.s32.totalorder %s200, %s216
      %p218 = scmp.eq.s32.totalorder %s34, 0
      %p219 = por %p217, %p218
      %s220 = ssub.s32 %s36, %s43
      %p221 = scmp.eq.s32.totalorder %s220, 0
      %s223 = sadd.s32 %s222, 1
      %s224 = scalar_select %p221, %s222, %s223
      %p227 = pneg %p221
      %p228 = scmp.eq.s32.totalorder %s28, 1
      %p229 = por %p227, %p228
      %p230 = scmp.ne.s32.totalorder %s222, %s225
      %p231 = scmp.eq.s32.totalorder %s28, 0
      %p232 = por %p230, %p231
      %p233 = scmp.ne.s32.totalorder %s222, %s225
      %p234 = scmp.eq.s32.totalorder %s33, 1
      %p235 = por %p233, %p234
      %p236 = scmp.ne.s32.totalorder %s225, %s226
      %p237 = scmp.eq.s32.totalorder %s33, 0
      %p238 = por %p236, %p237
      %p239 = scmp.ne.s32.totalorder %s225, %s226
      %p240 = scmp.eq.s32.totalorder %s34, 1
      %p241 = por %p239, %p240
      %p243 = scmp.ne.s32.totalorder %s226, %s242
      %p244 = scmp.eq.s32.totalorder %s34, 0
      %p245 = por %p243, %p244
      %s247 = sadd.s32 %s246, 1
      %p250 = scmp.eq.s32.totalorder %s28, 1
      %p251 = scmp.ne.s32.totalorder %s246, %s248
      %p252 = scmp.eq.s32.totalorder %s28, 0
      %p253 = por %p251, %p252
      %p254 = scmp.ne.s32.totalorder %s246, %s248
      %p255 = scmp.eq.s32.totalorder %s33, 1
      %p256 = por %p254, %p255
      %p257 = scmp.ne.s32.totalorder %s248, %s249
      %p258 = scmp.eq.s32.totalorder %s33, 0
      %p259 = por %p257, %p258
      %p260 = scmp.ne.s32.totalorder %s248, %s249
      %p261 = scmp.eq.s32.totalorder %s34, 1
      %p262 = por %p260, %p261
      %p264 = scmp.ne.s32.totalorder %s249, %s263
      %p265 = scmp.eq.s32.totalorder %s34, 0
      %p266 = por %p264, %p265
      %s267 = ssub.s32 %s35, %s47
      %p268 = scmp.eq.s32.totalorder %s267, 0
      %s270 = sadd.s32 %s269, 1
      %s271 = scalar_select %p268, %s269, %s270
      %p274 = pneg %p268
      %p275 = scmp.eq.s32.totalorder %s28, 1
      %p276 = por %p274, %p275
      %p277 = scmp.ne.s32.totalorder %s269, %s272
      %p278 = scmp.eq.s32.totalorder %s28, 0
      %p279 = por %p277, %p278
      %p280 = scmp.ne.s32.totalorder %s269, %s272
      %p281 = scmp.eq.s32.totalorder %s33, 1
      %p282 = por %p280, %p281
      %p283 = scmp.ne.s32.totalorder %s272, %s273
      %p284 = scmp.eq.s32.totalorder %s33, 0
      %p285 = por %p283, %p284
      %p286 = scmp.ne.s32.totalorder %s272, %s273
      %p287 = scmp.eq.s32.totalorder %s34, 1
      %p288 = por %p286, %p287
      %p290 = scmp.ne.s32.totalorder %s273, %s289
      %p291 = scmp.eq.s32.totalorder %s34, 0
      %p292 = por %p290, %p291
      %s293 = ssub.s32 %s35, %s47
      %s294 = ssub.s32 %s36, %s43
      %s295 = sor.u32 %s293, %s294
      %p296 = scmp.eq.s32.totalorder %s295, 0
      %s298 = sadd.s32 %s297, 1
      %s299 = scalar_select %p296, %s297, %s298
      %p302 = pneg %p296
      %p303 = scmp.eq.s32.totalorder %s28, 1
      %p304 = por %p302, %p303
      %p305 = scmp.ne.s32.totalorder %s297, %s300
      %p306 = scmp.eq.s32.totalorder %s28, 0
      %p307 = por %p305, %p306
      %p308 = scmp.ne.s32.totalorder %s297, %s300
      %p309 = scmp.eq.s32.totalorder %s33, 1
      %p310 = por %p308, %p309
      %p311 = scmp.ne.s32.totalorder %s300, %s301
      %p312 = scmp.eq.s32.totalorder %s33, 0
      %p313 = por %p311, %p312
      %p314 = scmp.ne.s32.totalorder %s300, %s301
      %p315 = scmp.eq.s32.totalorder %s34, 1
      %p316 = por %p314, %p315
      %p318 = scmp.ne.s32.totalorder %s301, %s317
      %p319 = scmp.eq.s32.totalorder %s34, 0
      %p320 = por %p318, %p319
      %p321 = scmp.le.s32.totalorder 1, %s28
      %p322 = scmp.lt.s32.totalorder %s28, 3
      %p323 = pnand %p321, %p322
      %p324 = pneg %p323
      // Predicated region
      $region9: #{tpu_custom_call.1} parent=5 // pred_check
        _
      $region10: #{tpu_custom_call.1} parent=5 // pred_check_branch
        %326 = sbr.rel (%p323) target = $region12
      $region11: #{tpu_custom_call.1} parent=5 // pred_region
        %s327 = ssub.s32 %s28, 1
        // Predicated region
        $region13: #{tpu_custom_call.1} parent=11 // pred_check
          %p328 = pneg %p87
        $region14: #{tpu_custom_call.1} parent=11 // pred_check_branch
          %330 = sbr.rel (%p328) target = $region16
        $region15: #{tpu_custom_call.1} parent=11 // pred_region
          _
        $region16: #{tpu_custom_call.1} parent=11 // pred_fallthru
          _
        // Predicated region
        $region17: #{tpu_custom_call.1} parent=11 // pred_check
          %p331 = pneg %p108
        $region18: #{tpu_custom_call.1} parent=11 // pred_check_branch
          %333 = sbr.rel (%p331) target = $region20
        $region19: #{tpu_custom_call.1} parent=11 // pred_region
          _
        $region20: #{tpu_custom_call.1} parent=11 // pred_fallthru
          _
        // Predicated region
        $region21: #{tpu_custom_call.1} parent=11 // pred_check
          %p334 = pneg %p134
        $region22: #{tpu_custom_call.1} parent=11 // pred_check_branch
          %336 = sbr.rel (%p334) target = $region24
        $region23: #{tpu_custom_call.1} parent=11 // pred_region
          %s338 = ssub.s32 512, 512
          %339 = vsyncadd [#allocation8], %s338
          %s340 = smul.addr %s38, 4
          %s341 = smul.addr %s340, 128
          %s342 = scalar_lea.hbm %s3, %s341
          %s343 = sshll.u32 [#allocation7], 4
          %s344 = int_to_ptr.vmem [resolvable:$true] %s343
          %349 = dma.hbm_to_vmem [thread:$0]  %s342, 512, %s344, [#allocation8], 128, 128, 8
        $region24: #{tpu_custom_call.1} parent=11 // pred_fallthru
          _
        // Predicated region
        $region25: #{tpu_custom_call.1} parent=11 // pred_check
          %p350 = pneg %p160
        $region26: #{tpu_custom_call.1} parent=11 // pred_check_branch
          %352 = sbr.rel (%p350) target = $region28
        $region27: #{tpu_custom_call.1} parent=11 // pred_region
          %p353 = scmp.lt.s32.totalorder %s38, 0
          %s354 = scalar_select %p353, %s38, 0
          %s355 = scalar_lea.vmem %s4, %s354
        $region28: #{tpu_custom_call.1} parent=11 // pred_fallthru
          _
        // Predicated region
        $region29: #{tpu_custom_call.1} parent=11 // pred_check
          %p356 = pneg %p186
        $region30: #{tpu_custom_call.1} parent=11 // pred_check_branch
          %358 = sbr.rel (%p356) target = $region32
        $region31: #{tpu_custom_call.1} parent=11 // pred_region
          %s360 = ssub.s32 512, 512
          %361 = vsyncadd [#allocation8], %s360
          %s362 = smul.addr %s38, 4
          %s363 = smul.addr %s362, 128
          %s364 = scalar_lea.hbm %s5, %s363
          %s365 = sshll.u32 [#allocation9], 4
          %s366 = int_to_ptr.vmem [resolvable:$true] %s365
          %371 = dma.hbm_to_vmem [thread:$0]  %s364, 512, %s366, [#allocation8], 128, 128, 8
        $region32: #{tpu_custom_call.1} parent=11 // pred_fallthru
          _
        // Predicated region
        $region33: #{tpu_custom_call.1} parent=11 // pred_check
          %p372 = pneg %p212
        $region34: #{tpu_custom_call.1} parent=11 // pred_check_branch
          %374 = sbr.rel (%p372) target = $region36
        $region35: #{tpu_custom_call.1} parent=11 // pred_region
          %p375 = scmp.lt.s32.totalorder %s38, 0
          %s376 = scalar_select %p375, %s38, 0
          %s377 = scalar_lea.vmem %s6, %s376
        $region36: #{tpu_custom_call.1} parent=11 // pred_fallthru
          _
        // Predicated region
        $region37: #{tpu_custom_call.1} parent=11 // pred_check
          %p378 = pneg %p238
        $region38: #{tpu_custom_call.1} parent=11 // pred_check_branch
          %380 = sbr.rel (%p378) target = $region40
        $region39: #{tpu_custom_call.1} parent=11 // pred_region
          %s382 = ssub.s32 512, 512
          %383 = vsyncadd [#allocation11], %s382
          %s384 = smul.addr %s38, 4
          %s385 = smul.addr %s384, 128
          %s386 = scalar_lea.hbm %s7, %s385
          %s387 = sshll.u32 [#allocation10], 4
          %s388 = int_to_ptr.vmem [resolvable:$true] %s387
          %393 = dma.hbm_to_vmem [thread:$0]  %s386, 512, %s388, [#allocation11], 128, 128, 8
        $region40: #{tpu_custom_call.1} parent=11 // pred_fallthru
          _
        // Predicated region
        $region41: #{tpu_custom_call.1} parent=11 // pred_check
          %p394 = pneg %p259
        $region42: #{tpu_custom_call.1} parent=11 // pred_check_branch
          %396 = sbr.rel (%p394) target = $region44
        $region43: #{tpu_custom_call.1} parent=11 // pred_region
          _
        $region44: #{tpu_custom_call.1} parent=11 // pred_fallthru
          _
      $region12: #{tpu_custom_call.1} parent=5 // pred_fallthru
        _
      %p397 = scmp.lt.s32.totalorder %s28, 2
      // Predicated region
      $region45: #{tpu_custom_call.1} parent=5 // pred_check
        %p398 = pneg %p397
      $region46: #{tpu_custom_call.1} parent=5 // pred_check_branch
        %400 = sbr.rel (%p398) target = $region48
      $region47: #{tpu_custom_call.1} parent=5 // pred_region
        // Predicated region
        $region49: #{tpu_custom_call.1} parent=47 // pred_check
          %p401 = pneg %p60
        $region50: #{tpu_custom_call.1} parent=47 // pred_check_branch
          %403 = sbr.rel (%p401) target = $region52
        $region51: #{tpu_custom_call.1} parent=47 // pred_region
          %s404 = sand.u32 %s50, 1
          %s405 = scalar_lea.sflag [#allocation5], %s404
          %s406 = sand.u32 %s50, 1
          %s407 = smul.addr %s406, 8
          %s408 = scalar_lea.vmem [#allocation4], %s407
          %s410 = ssub.s32 128, 128
          %411 = vsyncadd %s405, %s410
          %s412 = smul.addr %s35, 128
          %s413 = scalar_lea.hbm %s0, %s412
          %s415 = sshll.u32 %s408, 4
          %s416 = int_to_ptr.vmem [resolvable:$true] %s415
          %418 = dma.hbm_to_vmem [thread:$0]  %s413, 128, %s416, %s405
        $region52: #{tpu_custom_call.1} parent=47 // pred_fallthru
          _
      $region48: #{tpu_custom_call.1} parent=5 // pred_fallthru
        _
      %p419 = scmp.le.s32.totalorder 1, %s28
      %p420 = scmp.lt.s32.totalorder %s28, 3
      %p421 = pnand %p419, %p420
      %p422 = pneg %p421
      // Predicated region
      $region53: #{tpu_custom_call.1} parent=5 // pred_check
        _
      $region54: #{tpu_custom_call.1} parent=5 // pred_check_branch
        %424 = sbr.rel (%p421) target = $region56
      $region55: #{tpu_custom_call.1} parent=5 // pred_region
        %s425 = ssub.s32 %s28, 1
        %s426 = sand.u32 %s53, 1
        %s427 = scalar_lea.sflag [#allocation5], %s426
        %s428 = sand.u32 %s53, 1
        %s429 = smul.addr %s428, 8
        %s430 = scalar_lea.vmem [#allocation4], %s429
        // Predicated region
        $region57: #{tpu_custom_call.1} parent=55 // pred_check
          %p431 = pneg %p66
        $region58: #{tpu_custom_call.1} parent=55 // pred_check_branch
          %433 = sbr.rel (%p431) target = $region60
        $region59: #{tpu_custom_call.1} parent=55 // pred_region
          %434 = dma.done %s427, 128
        $region60: #{tpu_custom_call.1} parent=55 // pred_fallthru
          _
        // Predicated region
        $region61: #{tpu_custom_call.1} parent=55 // pred_check
          %p435 = pneg %p134
        $region62: #{tpu_custom_call.1} parent=55 // pred_check_branch
          %437 = sbr.rel (%p435) target = $region64
        $region63: #{tpu_custom_call.1} parent=55 // pred_region
          %438 = dma.done [#allocation8], 512
        $region64: #{tpu_custom_call.1} parent=55 // pred_fallthru
          _
        // Predicated region
        $region65: #{tpu_custom_call.1} parent=55 // pred_check
          %p439 = pneg %p186
        $region66: #{tpu_custom_call.1} parent=55 // pred_check_branch
          %441 = sbr.rel (%p439) target = $region68
        $region67: #{tpu_custom_call.1} parent=55 // pred_region
          %442 = dma.done [#allocation8], 512
        $region68: #{tpu_custom_call.1} parent=55 // pred_fallthru
          _
        // Predicated region
        $region69: #{tpu_custom_call.1} parent=55 // pred_check
          %p443 = pneg %p238
        $region70: #{tpu_custom_call.1} parent=55 // pred_check_branch
          %445 = sbr.rel (%p443) target = $region72
        $region71: #{tpu_custom_call.1} parent=55 // pred_region
          %446 = dma.done [#allocation11], 512
        $region72: #{tpu_custom_call.1} parent=55 // pred_fallthru
          _
        %s447 = sand.u32 %s53, 1
        %s448 = scalar_lea.sflag [#allocation5], %s447
        %s449 = sand.u32 %s53, 1
        %s450 = smul.addr %s449, 8
        %s451 = scalar_lea.vmem [#allocation4], %s450
        %p452 = pneg %p66
        %p453 = pneg %p63
        %p454 = pneg %p87
        %p455 = pneg %p84
        %p456 = pneg %p108
        %p457 = pneg %p105
        %p458 = pneg %p134
        %p459 = pneg %p131
        %p460 = scmp.lt.s32.totalorder %s38, 0
        %s461 = scalar_select %p460, %s38, 0
        %s462 = scalar_lea.vmem %s4, %s461
        %p463 = pneg %p160
        %p464 = pneg %p157
        %p465 = pneg %p186
        %p466 = pneg %p183
        %p467 = scmp.lt.s32.totalorder %s38, 0
        %s468 = scalar_select %p467, %s38, 0
        %s469 = scalar_lea.vmem %s6, %s468
        %p470 = pneg %p212
        %p471 = pneg %p209
        %p472 = pneg %p238
        %p473 = pneg %p235
        %p474 = pneg %p259
        %p475 = pneg %p256
        %p476 = pneg %p285
        %p477 = pneg %p282
        %s478 = sand.u32 %s272, 1
        %s479 = scalar_lea.sflag [#allocation6], %s478
        %s480 = sand.u32 %s272, 1
        %s481 = smul.addr %s480, 8
        %s482 = scalar_lea.vmem [#allocation12], %s481
        %p483 = pneg %p313
        %p484 = pneg %p310
        %s485 = sand.u32 %s300, 1
        %s486 = scalar_lea.sflag [#allocation14], %s485
        %s487 = sand.u32 %s300, 1
        %s488 = smul.addr %s487, 32
        %s489 = scalar_lea.vmem [#allocation13], %s488
        %p490 = scmp.lt.s32.totalorder %s38, 0
        %s491 = scalar_select %p490, %s38, 0
        %s492 = scalar_lea.vmem %s4, %s491
        %p493 = scmp.lt.s32.totalorder %s38, 0
        %s494 = scalar_select %p493, %s38, 0
        %s495 = scalar_lea.vmem %s6, %s494
        %s496 = smul.u32 4, %s38
        %p497 = scmp.eq.s32.totalorder %s38, 0
        // Predicated region
        $region73: #{tpu_custom_call.1} parent=55 // pred_check
          %p498 = pneg %p497
        $region74: #{tpu_custom_call.1} parent=55 // pred_check_branch
          %500 = sbr.rel (%p498) target = $region76
        $region75: #{tpu_custom_call.1} parent=55 // pred_region
          %v501 = vld [vmem:[%s430] sm:$0xff]
          %v502 = vld [vmem:[%s1] sm:$0x1]
          %v503 = vld [vmem:[%s2] sm:$0x1]
          %vm504 = vcmask 261120
          %v505 = vsel %vm504, %v501, 0.0
          %506 = vadd.xlane.f32.xlu0 %v505
          %v507 = vpop.xlane.xlu0 %506
          %v508 = vrcp.pop 32.0
          %v509 = vmul.f32 %v507, %v508
          %v510 = vsub.f32 %v501, %v509
          %v511 = vmul.f32 %v510, %v510
          %v512 = vsel %vm504, %v511, 0.0
          %513 = vadd.xlane.f32.xlu0 %v512
          %v514 = vpop.xlane.xlu0 %513
          %v515 = vmul.f32 %v514, %v508
          %v516 = vadd.f32 %v515, 1e-05
          %v517 = vrsqrt.pop %v516
          %v518 = vmul.f32 %v510, %v517
          %v520 = vlaneseq
          %v521 = vshrl.u32 %v520, 7
          %v522 = vsub.s32 0, %v521
          %v523 = vrot.slane %v502, %v522
          %v525 = vmul.f32 %v518, %v523
          %v527 = vlaneseq
          %v528 = vshrl.u32 %v527, 7
          %v529 = vsub.s32 0, %v528
          %v530 = vrot.slane %v503, %v529
          %v532 = vadd.f32 %v525, %v530
          %533 = vst.msk [vmem:[#allocation2] sm:$0xff] %vm504, %v532
          %534 = vst.msk [vmem:[#allocation3] sm:$0xff] %vm504, 0.0
        $region76: #{tpu_custom_call.1} parent=55 // pred_fallthru
          _
        %v535 = vld [vmem:[#allocation2] sm:$0xff]
        %v536 = vld [vmem:[#allocation7] sm:$0xff]
        %v537 = vld [vmem:[#allocation7 + $0x8] sm:$0xff]
        %v538 = vld [vmem:[#allocation7 + $0x10] sm:$0xff]
        %v539 = vld [vmem:[#allocation7 + $0x18] sm:$0xff]
        %v540 = vld [vmem:[%s492] sm:$0x1]
        %v542 = vlaneseq
        %v543 = vshrl.u32 %v542, 7
        %v544 = vsub.s32 0, %v543
        %v545 = vrot.slane %v540, %v544
        %vm547 = vcmask 261120
        %v549 = vsel %vm547, %v535, 0
        %551 = vmatprep.subr.mxu0 0.0
        %552 = vmatpush1.msra.mxu0 %v536
        %553 = vmatprep.subr.mxu0 0.0
        %554 = vmatpush1.msra.mxu0 %v537
        %555 = vmatprep.subr.mxu0 0.0
        %556 = vmatpush1.msra.mxu0 %v538
        %557 = vmatprep.subr.mxu0 0.0
        %558 = vmatpush1.msra.mxu0 %v539
        %559 = vmatprep.subr.mxu0 0.0
        %560 = vmatpush1.msra.mxu0 0.0
        %561 = vmatprep.subr.mxu0 0.0
        %562 = vmatpush1.msra.mxu0 0.0
        %563 = vmatprep.subr.mxu0 0.0
        %564 = vmatpush1.msra.mxu0 0.0
        %565 = vmatprep.subr.mxu0 0.0
        %566 = vmatpush1.msra.mxu0 0.0
        %567 = vmatprep.subr.mxu0 0.0
        %568 = vmatpush1.msra.mxu0 0.0
        %569 = vmatprep.subr.mxu0 0.0
        %570 = vmatpush1.msra.mxu0 0.0
        %571 = vmatprep.subr.mxu0 0.0
        %572 = vmatpush1.msra.mxu0 0.0
        %573 = vmatprep.subr.mxu0 0.0
        %574 = vmatpush1.msra.mxu0 0.0
        %575 = vmatprep.subr.mxu0 0.0
        %576 = vmatpush1.msra.mxu0 0.0
        %577 = vmatprep.subr.mxu0 0.0
        %578 = vmatpush1.msra.mxu0 0.0
        %579 = vmatprep.subr.mxu0 0.0
        %580 = vmatpush1.msra.mxu0 0.0
        %581 = vmatprep.subr.mxu0 0.0
        %582 = vmatpush1.msra.mxu0 0.0
        %583 = vmatprep.subr.mxu0 0.0
        %584 = vmatpush1.msra.mxu0 0.0
        %585 = vmatprep.subr.mxu0 0.0
        %586 = vmatpush1.msra.mxu0 0.0
        %587 = vmatprep.subr.mxu0 0.0
        %588 = vmatpush1.msra.mxu0 0.0
        %589 = vmatprep.subr.mxu0 0.0
        %590 = vmatpush1.msra.mxu0 0.0
        %591 = vmatprep.subr.mxu0 0.0
        %592 = vmatpush1.msra.mxu0 0.0
        %593 = vmatprep.subr.mxu0 0.0
        %594 = vmatpush1.msra.mxu0 0.0
        %595 = vmatprep.subr.mxu0 0.0
        %596 = vmatpush1.msra.mxu0 0.0
        %597 = vmatprep.subr.mxu0 0.0
        %598 = vmatpush1.msra.mxu0 0.0
        %599 = vmatprep.subr.mxu0 0.0
        %600 = vmatpush1.msra.mxu0 0.0
        %601 = vmatprep.subr.mxu0 0.0
        %602 = vmatpush1.msra.mxu0 0.0
        %603 = vmatprep.subr.mxu0 0.0
        %604 = vmatpush1.msra.mxu0 0.0
        %605 = vmatprep.subr.mxu0 0.0
        %606 = vmatpush1.msra.mxu0 0.0
        %607 = vmatprep.subr.mxu0 0.0
        %608 = vmatpush1.msra.mxu0 0.0
        %609 = vmatprep.subr.mxu0 0.0
        %610 = vmatpush1.msra.mxu0 0.0
        %611 = vmatprep.subr.mxu0 0.0
        %612 = vmatpush1.msra.mxu0 0.0
        %613 = vmatprep.subr.mxu0 0.0
        %614 = vmatpush1.msra.mxu0 0.0
        %615 = vmatprep.mubr.f32.mxu0 0.0
        %616 = vmatmul.mubr.f32.gmra.mrb[0].mxu0 %v549
        %v617 = vpop.f32.mrb[0].mxu0
        %v618 = vadd.f32 %v545, %v617
        %v619 = vpop.f32.mrb[0].mxu0
        %620 = vdwg.mxu0
        %v621 = vld [vmem:[#allocation9] sm:$0xff]
        %v622 = vld [vmem:[#allocation9 + $0x8] sm:$0xff]
        %v623 = vld [vmem:[#allocation9 + $0x10] sm:$0xff]
        %v624 = vld [vmem:[#allocation9 + $0x18] sm:$0xff]
        %v625 = vld [vmem:[%s495] sm:$0x1]
        %v627 = vlaneseq
        %v628 = vshrl.u32 %v627, 7
        %v629 = vsub.s32 0, %v628
        %v630 = vrot.slane %v625, %v629
        %632 = vmatprep.subr.mxu0 0.0
        %633 = vmatpush1.msra.mxu0 %v621
        %634 = vmatprep.subr.mxu0 0.0
        %635 = vmatpush1.msra.mxu0 %v622
        %636 = vmatprep.subr.mxu0 0.0
        %637 = vmatpush1.msra.mxu0 %v623
        %638 = vmatprep.subr.mxu0 0.0
        %639 = vmatpush1.msra.mxu0 %v624
        %640 = vmatprep.subr.mxu0 0.0
        %641 = vmatpush1.msra.mxu0 0.0
        %642 = vmatprep.subr.mxu0 0.0
        %643 = vmatpush1.msra.mxu0 0.0
        %644 = vmatprep.subr.mxu0 0.0
        %645 = vmatpush1.msra.mxu0 0.0
        %646 = vmatprep.subr.mxu0 0.0
        %647 = vmatpush1.msra.mxu0 0.0
        %648 = vmatprep.subr.mxu0 0.0
        %649 = vmatpush1.msra.mxu0 0.0
        %650 = vmatprep.subr.mxu0 0.0
        %651 = vmatpush1.msra.mxu0 0.0
        %652 = vmatprep.subr.mxu0 0.0
        %653 = vmatpush1.msra.mxu0 0.0
        %654 = vmatprep.subr.mxu0 0.0
        %655 = vmatpush1.msra.mxu0 0.0
        %656 = vmatprep.subr.mxu0 0.0
        %657 = vmatpush1.msra.mxu0 0.0
        %658 = vmatprep.subr.mxu0 0.0
        %659 = vmatpush1.msra.mxu0 0.0
        %660 = vmatprep.subr.mxu0 0.0
        %661 = vmatpush1.msra.mxu0 0.0
        %662 = vmatprep.subr.mxu0 0.0
        %663 = vmatpush1.msra.mxu0 0.0
        %664 = vmatprep.subr.mxu0 0.0
        %665 = vmatpush1.msra.mxu0 0.0
        %666 = vmatprep.subr.mxu0 0.0
        %667 = vmatpush1.msra.mxu0 0.0
        %668 = vmatprep.subr.mxu0 0.0
        %669 = vmatpush1.msra.mxu0 0.0
        %670 = vmatprep.subr.mxu0 0.0
        %671 = vmatpush1.msra.mxu0 0.0
        %672 = vmatprep.subr.mxu0 0.0
        %673 = vmatpush1.msra.mxu0 0.0
        %674 = vmatprep.subr.mxu0 0.0
        %675 = vmatpush1.msra.mxu0 0.0
        %676 = vmatprep.subr.mxu0 0.0
        %677 = vmatpush1.msra.mxu0 0.0
        %678 = vmatprep.subr.mxu0 0.0
        %679 = vmatpush1.msra.mxu0 0.0
        %680 = vmatprep.subr.mxu0 0.0
        %681 = vmatpush1.msra.mxu0 0.0
        %682 = vmatprep.subr.mxu0 0.0
        %683 = vmatpush1.msra.mxu0 0.0
        %684 = vmatprep.subr.mxu0 0.0
        %685 = vmatpush1.msra.mxu0 0.0
        %686 = vmatprep.subr.mxu0 0.0
        %687 = vmatpush1.msra.mxu0 0.0
        %688 = vmatprep.subr.mxu0 0.0
        %689 = vmatpush1.msra.mxu0 0.0
        %690 = vmatprep.subr.mxu0 0.0
        %691 = vmatpush1.msra.mxu0 0.0
        %692 = vmatprep.subr.mxu0 0.0
        %693 = vmatpush1.msra.mxu0 0.0
        %694 = vmatprep.subr.mxu0 0.0
        %695 = vmatpush1.msra.mxu0 0.0
        %696 = vmatprep.mubr.f32.mxu0 0.0
        %697 = vmatmul.mubr.f32.gmra.mrb[0].mxu0 %v549
        %v698 = vpop.f32.mrb[0].mxu0
        %v699 = vadd.f32 %v630, %v698
        %v700 = vpop.f32.mrb[0].mxu0
        %701 = vdwg.mxu0
        %v702 = vmul.f32 %v699, 0.125
        %vm703 = vcmask 64512
        %v705 = vsel %vm703, %v702, 0
        %v708 = vsel %vm703, %v618, 0
        %710 = vmatprep.subr.mxu0 0.0
        %711 = vmatpush1.xpose.msra.mxu0 %v708
        %712 = vmatprep.subr.mxu0 0.0
        %713 = vmatpush1.xpose.msra.mxu0 0.0
        %714 = vmatprep.subr.mxu0 0.0
        %715 = vmatpush1.xpose.msra.mxu0 0.0
        %716 = vmatprep.subr.mxu0 0.0
        %717 = vmatpush1.xpose.msra.mxu0 0.0
        %718 = vmatprep.subr.mxu0 0.0
        %719 = vmatpush1.xpose.msra.mxu0 0.0
        %720 = vmatprep.subr.mxu0 0.0
        %721 = vmatpush1.xpose.msra.mxu0 0.0
        %722 = vmatprep.subr.mxu0 0.0
        %723 = vmatpush1.xpose.msra.mxu0 0.0
        %724 = vmatprep.subr.mxu0 0.0
        %725 = vmatpush1.xpose.msra.mxu0 0.0
        %726 = vmatprep.subr.mxu0 0.0
        %727 = vmatpush1.xpose.msra.mxu0 0.0
        %728 = vmatprep.subr.mxu0 0.0
        %729 = vmatpush1.xpose.msra.mxu0 0.0
        %730 = vmatprep.subr.mxu0 0.0
        %731 = vmatpush1.xpose.msra.mxu0 0.0
        %732 = vmatprep.subr.mxu0 0.0
        %733 = vmatpush1.xpose.msra.mxu0 0.0
        %734 = vmatprep.subr.mxu0 0.0
        %735 = vmatpush1.xpose.msra.mxu0 0.0
        %736 = vmatprep.subr.mxu0 0.0
        %737 = vmatpush1.xpose.msra.mxu0 0.0
        %738 = vmatprep.subr.mxu0 0.0
        %739 = vmatpush1.xpose.msra.mxu0 0.0
        %740 = vmatprep.subr.mxu0 0.0
        %741 = vmatpush1.xpose.msra.mxu0 0.0
        %742 = vmatprep.subr.mxu0 0.0
        %743 = vmatpush1.xpose.msra.mxu0 0.0
        %744 = vmatprep.subr.mxu0 0.0
        %745 = vmatpush1.xpose.msra.mxu0 0.0
        %746 = vmatprep.subr.mxu0 0.0
        %747 = vmatpush1.xpose.msra.mxu0 0.0
        %748 = vmatprep.subr.mxu0 0.0
        %749 = vmatpush1.xpose.msra.mxu0 0.0
        %750 = vmatprep.subr.mxu0 0.0
        %751 = vmatpush1.xpose.msra.mxu0 0.0
        %752 = vmatprep.subr.mxu0 0.0
        %753 = vmatpush1.xpose.msra.mxu0 0.0
        %754 = vmatprep.subr.mxu0 0.0
        %755 = vmatpush1.xpose.msra.mxu0 0.0
        %756 = vmatprep.subr.mxu0 0.0
        %757 = vmatpush1.xpose.msra.mxu0 0.0
        %758 = vmatprep.subr.mxu0 0.0
        %759 = vmatpush1.xpose.msra.mxu0 0.0
        %760 = vmatprep.subr.mxu0 0.0
        %761 = vmatpush1.xpose.msra.mxu0 0.0
        %762 = vmatprep.subr.mxu0 0.0
        %763 = vmatpush1.xpose.msra.mxu0 0.0
        %764 = vmatprep.subr.mxu0 0.0
        %765 = vmatpush1.xpose.msra.mxu0 0.0
        %766 = vmatprep.subr.mxu0 0.0
        %767 = vmatpush1.xpose.msra.mxu0 0.0
        %768 = vmatprep.subr.mxu0 0.0
        %769 = vmatpush1.xpose.msra.mxu0 0.0
        %770 = vmatprep.subr.mxu0 0.0
        %771 = vmatpush1.xpose.msra.mxu0 0.0
        %772 = vmatprep.subr.mxu0 0.0
        %773 = vmatpush1.xpose.msra.mxu0 0.0
        %774 = vmatprep.mubr.f32.mxu0 0.0
        %775 = vmatmul.mubr.f32.gmra.mrb[0].mxu0 %v705
        %v776 = vpop.f32.mrb[0].mxu0
        %v777 = vadd.f32 0.0, %v776
        %v778 = vpop.f32.mrb[0].mxu0
        %779 = vdwg.mxu0
        %v780 = vsel %vm703, %v777, -inf
        %781 = vmax.xlane.f32.xlu0 %v780
        %v782 = vpop.xlane.xlu0 %781
        %v783 = vsub.f32 %v777, %v782
        %v784 = vmul.f32 %v783, 1.442695
        %v785 = vpow.pop %v784
        %v786 = vsel %vm703, %v785, 0.0
        %787 = vadd.xlane.f32.xlu0 %v786
        %v788 = vpop.xlane.xlu0 %787
        %v789 = vrcp.pop %v788
        %v790 = vmul.f32 %v785, %v789
        %791 = vst.msk [vmem:[%s489] sm:$0xff] %vm703, %v790
        %v793 = vsel %vm703, %v790, 0
        %795 = vmatprep.subr.mxu0 0.0
        %796 = vmatpush1.msra.mxu0 %v618
        %797 = vmatprep.subr.mxu0 0.0
        %798 = vmatpush1.msra.mxu0 0.0
        %799 = vmatprep.subr.mxu0 0.0
        %800 = vmatpush1.msra.mxu0 0.0
        %801 = vmatprep.subr.mxu0 0.0
        %802 = vmatpush1.msra.mxu0 0.0
        %803 = vmatprep.subr.mxu0 0.0
        %804 = vmatpush1.msra.mxu0 0.0
        %805 = vmatprep.subr.mxu0 0.0
        %806 = vmatpush1.msra.mxu0 0.0
        %807 = vmatprep.subr.mxu0 0.0
        %808 = vmatpush1.msra.mxu0 0.0
        %809 = vmatprep.subr.mxu0 0.0
        %810 = vmatpush1.msra.mxu0 0.0
        %811 = vmatprep.subr.mxu0 0.0
        %812 = vmatpush1.msra.mxu0 0.0
        %813 = vmatprep.subr.mxu0 0.0
        %814 = vmatpush1.msra.mxu0 0.0
        %815 = vmatprep.subr.mxu0 0.0
        %816 = vmatpush1.msra.mxu0 0.0
        %817 = vmatprep.subr.mxu0 0.0
        %818 = vmatpush1.msra.mxu0 0.0
        %819 = vmatprep.subr.mxu0 0.0
        %820 = vmatpush1.msra.mxu0 0.0
        %821 = vmatprep.subr.mxu0 0.0
        %822 = vmatpush1.msra.mxu0 0.0
        %823 = vmatprep.subr.mxu0 0.0
        %824 = vmatpush1.msra.mxu0 0.0
        %825 = vmatprep.subr.mxu0 0.0
        %826 = vmatpush1.msra.mxu0 0.0
        %827 = vmatprep.subr.mxu0 0.0
        %828 = vmatpush1.msra.mxu0 0.0
        %829 = vmatprep.subr.mxu0 0.0
        %830 = vmatpush1.msra.mxu0 0.0
        %831 = vmatprep.subr.mxu0 0.0
        %832 = vmatpush1.msra.mxu0 0.0
        %833 = vmatprep.subr.mxu0 0.0
        %834 = vmatpush1.msra.mxu0 0.0
        %835 = vmatprep.subr.mxu0 0.0
        %836 = vmatpush1.msra.mxu0 0.0
        %837 = vmatprep.subr.mxu0 0.0
        %838 = vmatpush1.msra.mxu0 0.0
        %839 = vmatprep.subr.mxu0 0.0
        %840 = vmatpush1.msra.mxu0 0.0
        %841 = vmatprep.subr.mxu0 0.0
        %842 = vmatpush1.msra.mxu0 0.0
        %843 = vmatprep.subr.mxu0 0.0
        %844 = vmatpush1.msra.mxu0 0.0
        %845 = vmatprep.subr.mxu0 0.0
        %846 = vmatpush1.msra.mxu0 0.0
        %847 = vmatprep.subr.mxu0 0.0
        %848 = vmatpush1.msra.mxu0 0.0
        %849 = vmatprep.subr.mxu0 0.0
        %850 = vmatpush1.msra.mxu0 0.0
        %851 = vmatprep.subr.mxu0 0.0
        %852 = vmatpush1.msra.mxu0 0.0
        %853 = vmatprep.subr.mxu0 0.0
        %854 = vmatpush1.msra.mxu0 0.0
        %855 = vmatprep.subr.mxu0 0.0
        %856 = vmatpush1.msra.mxu0 0.0
        %857 = vmatprep.subr.mxu0 0.0
        %858 = vmatpush1.msra.mxu0 0.0
        %859 = vmatprep.mubr.f32.mxu0 0.0
        %860 = vmatmul.mubr.f32.gmra.mrb[0].mxu0 %v793
        %v861 = vpop.f32.mrb[0].mxu0
        %v862 = vadd.f32 0.0, %v861
        %v863 = vpop.f32.mrb[0].mxu0
        %864 = vdwg.mxu0
        %865 = vrot.lane.b32.xlu0 %v702, 120
        %v866 = vpop.permute.xlu0 %865
        %867 = vrot.lane.b32.xlu0 %v618, 120
        %v868 = vpop.permute.xlu0 %867
        %v869 = vsel %vm703, %v866, 0
        %v871 = vsel %vm703, %v868, 0
        %873 = vmatprep.subr.mxu0 0.0
        %874 = vmatpush1.xpose.msra.mxu0 %v871
        %875 = vmatprep.subr.mxu0 0.0
        %876 = vmatpush1.xpose.msra.mxu0 0.0
        %877 = vmatprep.subr.mxu0 0.0
        %878 = vmatpush1.xpose.msra.mxu0 0.0
        %879 = vmatprep.subr.mxu0 0.0
        %880 = vmatpush1.xpose.msra.mxu0 0.0
        %881 = vmatprep.subr.mxu0 0.0
        %882 = vmatpush1.xpose.msra.mxu0 0.0
        %883 = vmatprep.subr.mxu0 0.0
        %884 = vmatpush1.xpose.msra.mxu0 0.0
        %885 = vmatprep.subr.mxu0 0.0
        %886 = vmatpush1.xpose.msra.mxu0 0.0
        %887 = vmatprep.subr.mxu0 0.0
        %888 = vmatpush1.xpose.msra.mxu0 0.0
        %889 = vmatprep.subr.mxu0 0.0
        %890 = vmatpush1.xpose.msra.mxu0 0.0
        %891 = vmatprep.subr.mxu0 0.0
        %892 = vmatpush1.xpose.msra.mxu0 0.0
        %893 = vmatprep.subr.mxu0 0.0
        %894 = vmatpush1.xpose.msra.mxu0 0.0
        %895 = vmatprep.subr.mxu0 0.0
        %896 = vmatpush1.xpose.msra.mxu0 0.0
        %897 = vmatprep.subr.mxu0 0.0
        %898 = vmatpush1.xpose.msra.mxu0 0.0
        %899 = vmatprep.subr.mxu0 0.0
        %900 = vmatpush1.xpose.msra.mxu0 0.0
        %901 = vmatprep.subr.mxu0 0.0
        %902 = vmatpush1.xpose.msra.mxu0 0.0
        %903 = vmatprep.subr.mxu0 0.0
        %904 = vmatpush1.xpose.msra.mxu0 0.0
        %905 = vmatprep.subr.mxu0 0.0
        %906 = vmatpush1.xpose.msra.mxu0 0.0
        %907 = vmatprep.subr.mxu0 0.0
        %908 = vmatpush1.xpose.msra.mxu0 0.0
        %909 = vmatprep.subr.mxu0 0.0
        %910 = vmatpush1.xpose.msra.mxu0 0.0
        %911 = vmatprep.subr.mxu0 0.0
        %912 = vmatpush1.xpose.msra.mxu0 0.0
        %913 = vmatprep.subr.mxu0 0.0
        %914 = vmatpush1.xpose.msra.mxu0 0.0
        %915 = vmatprep.subr.mxu0 0.0
        %916 = vmatpush1.xpose.msra.mxu0 0.0
        %917 = vmatprep.subr.mxu0 0.0
        %918 = vmatpush1.xpose.msra.mxu0 0.0
        %919 = vmatprep.subr.mxu0 0.0
        %920 = vmatpush1.xpose.msra.mxu0 0.0
        %921 = vmatprep.subr.mxu0 0.0
        %922 = vmatpush1.xpose.msra.mxu0 0.0
        %923 = vmatprep.subr.mxu0 0.0
        %924 = vmatpush1.xpose.msra.mxu0 0.0
        %925 = vmatprep.subr.mxu0 0.0
        %926 = vmatpush1.xpose.msra.mxu0 0.0
        %927 = vmatprep.subr.mxu0 0.0
        %928 = vmatpush1.xpose.msra.mxu0 0.0
        %929 = vmatprep.subr.mxu0 0.0
        %930 = vmatpush1.xpose.msra.mxu0 0.0
        %931 = vmatprep.subr.mxu0 0.0
        %932 = vmatpush1.xpose.msra.mxu0 0.0
        %933 = vmatprep.subr.mxu0 0.0
        %934 = vmatpush1.xpose.msra.mxu0 0.0
        %935 = vmatprep.subr.mxu0 0.0
        %936 = vmatpush1.xpose.msra.mxu0 0.0
        %937 = vmatprep.mubr.f32.mxu0 0.0
        %938 = vmatmul.mubr.f32.gmra.mrb[0].mxu0 %v869
        %v939 = vpop.f32.mrb[0].mxu0
        %v940 = vadd.f32 0.0, %v939
        %v941 = vpop.f32.mrb[0].mxu0
        %942 = vdwg.mxu0
        %v943 = vsel %vm703, %v940, -inf
        %944 = vmax.xlane.f32.xlu0 %v943
        %v945 = vpop.xlane.xlu0 %944
        %v946 = vsub.f32 %v940, %v945
        %v947 = vmul.f32 %v946, 1.442695
        %v948 = vpow.pop %v947
        %v949 = vsel %vm703, %v948, 0.0
        %950 = vadd.xlane.f32.xlu0 %v949
        %v951 = vpop.xlane.xlu0 %950
        %v952 = vrcp.pop %v951
        %v953 = vmul.f32 %v948, %v952
        %s954 = scalar_lea.vmem %s489, 8 [#allocation13]
        %955 = vst.msk [vmem:[%s954] sm:$0xff] %vm703, %v953
        %v958 = vsel %vm703, %v953, 0
        %960 = vmatprep.subr.mxu0 0.0
        %961 = vmatpush1.msra.mxu0 %v868
        %962 = vmatprep.subr.mxu0 0.0
        %963 = vmatpush1.msra.mxu0 0.0
        %964 = vmatprep.subr.mxu0 0.0
        %965 = vmatpush1.msra.mxu0 0.0
        %966 = vmatprep.subr.mxu0 0.0
        %967 = vmatpush1.msra.mxu0 0.0
        %968 = vmatprep.subr.mxu0 0.0
        %969 = vmatpush1.msra.mxu0 0.0
        %970 = vmatprep.subr.mxu0 0.0
        %971 = vmatpush1.msra.mxu0 0.0
        %972 = vmatprep.subr.mxu0 0.0
        %973 = vmatpush1.msra.mxu0 0.0
        %974 = vmatprep.subr.mxu0 0.0
        %975 = vmatpush1.msra.mxu0 0.0
        %976 = vmatprep.subr.mxu0 0.0
        %977 = vmatpush1.msra.mxu0 0.0
        %978 = vmatprep.subr.mxu0 0.0
        %979 = vmatpush1.msra.mxu0 0.0
        %980 = vmatprep.subr.mxu0 0.0
        %981 = vmatpush1.msra.mxu0 0.0
        %982 = vmatprep.subr.mxu0 0.0
        %983 = vmatpush1.msra.mxu0 0.0
        %984 = vmatprep.subr.mxu0 0.0
        %985 = vmatpush1.msra.mxu0 0.0
        %986 = vmatprep.subr.mxu0 0.0
        %987 = vmatpush1.msra.mxu0 0.0
        %988 = vmatprep.subr.mxu0 0.0
        %989 = vmatpush1.msra.mxu0 0.0
        %990 = vmatprep.subr.mxu0 0.0
        %991 = vmatpush1.msra.mxu0 0.0
        %992 = vmatprep.subr.mxu0 0.0
        %993 = vmatpush1.msra.mxu0 0.0
        %994 = vmatprep.subr.mxu0 0.0
        %995 = vmatpush1.msra.mxu0 0.0
        %996 = vmatprep.subr.mxu0 0.0
        %997 = vmatpush1.msra.mxu0 0.0
        %998 = vmatprep.subr.mxu0 0.0
        %999 = vmatpush1.msra.mxu0 0.0
        %1000 = vmatprep.subr.mxu0 0.0
        %1001 = vmatpush1.msra.mxu0 0.0
        %1002 = vmatprep.subr.mxu0 0.0
        %1003 = vmatpush1.msra.mxu0 0.0
        %1004 = vmatprep.subr.mxu0 0.0
        %1005 = vmatpush1.msra.mxu0 0.0
        %1006 = vmatprep.subr.mxu0 0.0
        %1007 = vmatpush1.msra.mxu0 0.0
        %1008 = vmatprep.subr.mxu0 0.0
        %1009 = vmatpush1.msra.mxu0 0.0
        %1010 = vmatprep.subr.mxu0 0.0
        %1011 = vmatpush1.msra.mxu0 0.0
        %1012 = vmatprep.subr.mxu0 0.0
        %1013 = vmatpush1.msra.mxu0 0.0
        %1014 = vmatprep.subr.mxu0 0.0
        %1015 = vmatpush1.msra.mxu0 0.0
        %1016 = vmatprep.subr.mxu0 0.0
        %1017 = vmatpush1.msra.mxu0 0.0
        %1018 = vmatprep.subr.mxu0 0.0
        %1019 = vmatpush1.msra.mxu0 0.0
        %1020 = vmatprep.subr.mxu0 0.0
        %1021 = vmatpush1.msra.mxu0 0.0
        %1022 = vmatprep.subr.mxu0 0.0
        %1023 = vmatpush1.msra.mxu0 0.0
        %1024 = vmatprep.mubr.f32.mxu0 0.0
        %1025 = vmatmul.mubr.f32.gmra.mrb[0].mxu0 %v958
        %v1026 = vpop.f32.mrb[0].mxu0
        %v1027 = vadd.f32 0.0, %v1026
        %v1028 = vpop.f32.mrb[0].mxu0
        %1029 = vdwg.mxu0
        %1030 = vrot.lane.b32.xlu0 %v702, 112
        %v1031 = vpop.permute.xlu0 %1030
        %1032 = vrot.lane.b32.xlu0 %v618, 112
        %v1033 = vpop.permute.xlu0 %1032
        %v1034 = vsel %vm703, %v1031, 0
        %v1036 = vsel %vm703, %v1033, 0
        %1038 = vmatprep.subr.mxu0 0.0
        %1039 = vmatpush1.xpose.msra.mxu0 %v1036
        %1040 = vmatprep.subr.mxu0 0.0
        %1041 = vmatpush1.xpose.msra.mxu0 0.0
        %1042 = vmatprep.subr.mxu0 0.0
        %1043 = vmatpush1.xpose.msra.mxu0 0.0
        %1044 = vmatprep.subr.mxu0 0.0
        %1045 = vmatpush1.xpose.msra.mxu0 0.0
        %1046 = vmatprep.subr.mxu0 0.0
        %1047 = vmatpush1.xpose.msra.mxu0 0.0
        %1048 = vmatprep.subr.mxu0 0.0
        %1049 = vmatpush1.xpose.msra.mxu0 0.0
        %1050 = vmatprep.subr.mxu0 0.0
        %1051 = vmatpush1.xpose.msra.mxu0 0.0
        %1052 = vmatprep.subr.mxu0 0.0
        %1053 = vmatpush1.xpose.msra.mxu0 0.0
        %1054 = vmatprep.subr.mxu0 0.0
        %1055 = vmatpush1.xpose.msra.mxu0 0.0
        %1056 = vmatprep.subr.mxu0 0.0
        %1057 = vmatpush1.xpose.msra.mxu0 0.0
        %1058 = vmatprep.subr.mxu0 0.0
        %1059 = vmatpush1.xpose.msra.mxu0 0.0
        %1060 = vmatprep.subr.mxu0 0.0
        %1061 = vmatpush1.xpose.msra.mxu0 0.0
        %1062 = vmatprep.subr.mxu0 0.0
        %1063 = vmatpush1.xpose.msra.mxu0 0.0
        %1064 = vmatprep.subr.mxu0 0.0
        %1065 = vmatpush1.xpose.msra.mxu0 0.0
        %1066 = vmatprep.subr.mxu0 0.0
        %1067 = vmatpush1.xpose.msra.mxu0 0.0
        %1068 = vmatprep.subr.mxu0 0.0
        %1069 = vmatpush1.xpose.msra.mxu0 0.0
        %1070 = vmatprep.subr.mxu0 0.0
        %1071 = vmatpush1.xpose.msra.mxu0 0.0
        %1072 = vmatprep.subr.mxu0 0.0
        %1073 = vmatpush1.xpose.msra.mxu0 0.0
        %1074 = vmatprep.subr.mxu0 0.0
        %1075 = vmatpush1.xpose.msra.mxu0 0.0
        %1076 = vmatprep.subr.mxu0 0.0
        %1077 = vmatpush1.xpose.msra.mxu0 0.0
        %1078 = vmatprep.subr.mxu0 0.0
        %1079 = vmatpush1.xpose.msra.mxu0 0.0
        %1080 = vmatprep.subr.mxu0 0.0
        %1081 = vmatpush1.xpose.msra.mxu0 0.0
        %1082 = vmatprep.subr.mxu0 0.0
        %1083 = vmatpush1.xpose.msra.mxu0 0.0
        %1084 = vmatprep.subr.mxu0 0.0
        %1085 = vmatpush1.xpose.msra.mxu0 0.0
        %1086 = vmatprep.subr.mxu0 0.0
        %1087 = vmatpush1.xpose.msra.mxu0 0.0
        %1088 = vmatprep.subr.mxu0 0.0
        %1089 = vmatpush1.xpose.msra.mxu0 0.0
        %1090 = vmatprep.subr.mxu0 0.0
        %1091 = vmatpush1.xpose.msra.mxu0 0.0
        %1092 = vmatprep.subr.mxu0 0.0
        %1093 = vmatpush1.xpose.msra.mxu0 0.0
        %1094 = vmatprep.subr.mxu0 0.0
        %1095 = vmatpush1.xpose.msra.mxu0 0.0
        %1096 = vmatprep.subr.mxu0 0.0
        %1097 = vmatpush1.xpose.msra.mxu0 0.0
        %1098 = vmatprep.subr.mxu0 0.0
        %1099 = vmatpush1.xpose.msra.mxu0 0.0
        %1100 = vmatprep.subr.mxu0 0.0
        %1101 = vmatpush1.xpose.msra.mxu0 0.0
        %1102 = vmatprep.mubr.f32.mxu0 0.0
        %1103 = vmatmul.mubr.f32.gmra.mrb[0].mxu0 %v1034
        %v1104 = vpop.f32.mrb[0].mxu0
        %v1105 = vadd.f32 0.0, %v1104
        %v1106 = vpop.f32.mrb[0].mxu0
        %1107 = vdwg.mxu0
        %v1108 = vsel %vm703, %v1105, -inf
        %1109 = vmax.xlane.f32.xlu0 %v1108
        %v1110 = vpop.xlane.xlu0 %1109
        %v1111 = vsub.f32 %v1105, %v1110
        %v1112 = vmul.f32 %v1111, 1.442695
        %v1113 = vpow.pop %v1112
        %v1114 = vsel %vm703, %v1113, 0.0
        %1115 = vadd.xlane.f32.xlu0 %v1114
        %v1116 = vpop.xlane.xlu0 %1115
        %v1117 = vrcp.pop %v1116
        %v1118 = vmul.f32 %v1113, %v1117
        %s1119 = scalar_lea.vmem %s489, 16 [#allocation13]
        %1120 = vst.msk [vmem:[%s1119] sm:$0xff] %vm703, %v1118
        %v1123 = vsel %vm703, %v1118, 0
        %1125 = vmatprep.subr.mxu0 0.0
        %1126 = vmatpush1.msra.mxu0 %v1033
        %1127 = vmatprep.subr.mxu0 0.0
        %1128 = vmatpush1.msra.mxu0 0.0
        %1129 = vmatprep.subr.mxu0 0.0
        %1130 = vmatpush1.msra.mxu0 0.0
        %1131 = vmatprep.subr.mxu0 0.0
        %1132 = vmatpush1.msra.mxu0 0.0
        %1133 = vmatprep.subr.mxu0 0.0
        %1134 = vmatpush1.msra.mxu0 0.0
        %1135 = vmatprep.subr.mxu0 0.0
        %1136 = vmatpush1.msra.mxu0 0.0
        %1137 = vmatprep.subr.mxu0 0.0
        %1138 = vmatpush1.msra.mxu0 0.0
        %1139 = vmatprep.subr.mxu0 0.0
        %1140 = vmatpush1.msra.mxu0 0.0
        %1141 = vmatprep.subr.mxu0 0.0
        %1142 = vmatpush1.msra.mxu0 0.0
        %1143 = vmatprep.subr.mxu0 0.0
        %1144 = vmatpush1.msra.mxu0 0.0
        %1145 = vmatprep.subr.mxu0 0.0
        %1146 = vmatpush1.msra.mxu0 0.0
        %1147 = vmatprep.subr.mxu0 0.0
        %1148 = vmatpush1.msra.mxu0 0.0
        %1149 = vmatprep.subr.mxu0 0.0
        %1150 = vmatpush1.msra.mxu0 0.0
        %1151 = vmatprep.subr.mxu0 0.0
        %1152 = vmatpush1.msra.mxu0 0.0
        %1153 = vmatprep.subr.mxu0 0.0
        %1154 = vmatpush1.msra.mxu0 0.0
        %1155 = vmatprep.subr.mxu0 0.0
        %1156 = vmatpush1.msra.mxu0 0.0
        %1157 = vmatprep.subr.mxu0 0.0
        %1158 = vmatpush1.msra.mxu0 0.0
        %1159 = vmatprep.subr.mxu0 0.0
        %1160 = vmatpush1.msra.mxu0 0.0
        %1161 = vmatprep.subr.mxu0 0.0
        %1162 = vmatpush1.msra.mxu0 0.0
        %1163 = vmatprep.subr.mxu0 0.0
        %1164 = vmatpush1.msra.mxu0 0.0
        %1165 = vmatprep.subr.mxu0 0.0
        %1166 = vmatpush1.msra.mxu0 0.0
        %1167 = vmatprep.subr.mxu0 0.0
        %1168 = vmatpush1.msra.mxu0 0.0
        %1169 = vmatprep.subr.mxu0 0.0
        %1170 = vmatpush1.msra.mxu0 0.0
        %1171 = vmatprep.subr.mxu0 0.0
        %1172 = vmatpush1.msra.mxu0 0.0
        %1173 = vmatprep.subr.mxu0 0.0
        %1174 = vmatpush1.msra.mxu0 0.0
        %1175 = vmatprep.subr.mxu0 0.0
        %1176 = vmatpush1.msra.mxu0 0.0
        %1177 = vmatprep.subr.mxu0 0.0
        %1178 = vmatpush1.msra.mxu0 0.0
        %1179 = vmatprep.subr.mxu0 0.0
        %1180 = vmatpush1.msra.mxu0 0.0
        %1181 = vmatprep.subr.mxu0 0.0
        %1182 = vmatpush1.msra.mxu0 0.0
        %1183 = vmatprep.subr.mxu0 0.0
        %1184 = vmatpush1.msra.mxu0 0.0
        %1185 = vmatprep.subr.mxu0 0.0
        %1186 = vmatpush1.msra.mxu0 0.0
        %1187 = vmatprep.subr.mxu0 0.0
        %1188 = vmatpush1.msra.mxu0 0.0
        %1189 = vmatprep.mubr.f32.mxu0 0.0
        %1190 = vmatmul.mubr.f32.gmra.mrb[0].mxu0 %v1123
        %v1191 = vpop.f32.mrb[0].mxu0
        %v1192 = vadd.f32 0.0, %v1191
        %v1193 = vpop.f32.mrb[0].mxu0
        %1194 = vdwg.mxu0
        %1195 = vrot.lane.b32.xlu0 %v702, 104
        %v1196 = vpop.permute.xlu0 %1195
        %1197 = vrot.lane.b32.xlu0 %v618, 104
        %v1198 = vpop.permute.xlu0 %1197
        %v1199 = vsel %vm703, %v1196, 0
        %v1201 = vsel %vm703, %v1198, 0
        %1203 = vmatprep.subr.mxu0 0.0
        %1204 = vmatpush1.xpose.msra.mxu0 %v1201
        %1205 = vmatprep.subr.mxu0 0.0
        %1206 = vmatpush1.xpose.msra.mxu0 0.0
        %1207 = vmatprep.subr.mxu0 0.0
        %1208 = vmatpush1.xpose.msra.mxu0 0.0
        %1209 = vmatprep.subr.mxu0 0.0
        %1210 = vmatpush1.xpose.msra.mxu0 0.0
        %1211 = vmatprep.subr.mxu0 0.0
        %1212 = vmatpush1.xpose.msra.mxu0 0.0
        %1213 = vmatprep.subr.mxu0 0.0
        %1214 = vmatpush1.xpose.msra.mxu0 0.0
        %1215 = vmatprep.subr.mxu0 0.0
        %1216 = vmatpush1.xpose.msra.mxu0 0.0
        %1217 = vmatprep.subr.mxu0 0.0
        %1218 = vmatpush1.xpose.msra.mxu0 0.0
        %1219 = vmatprep.subr.mxu0 0.0
        %1220 = vmatpush1.xpose.msra.mxu0 0.0
        %1221 = vmatprep.subr.mxu0 0.0
        %1222 = vmatpush1.xpose.msra.mxu0 0.0
        %1223 = vmatprep.subr.mxu0 0.0
        %1224 = vmatpush1.xpose.msra.mxu0 0.0
        %1225 = vmatprep.subr.mxu0 0.0
        %1226 = vmatpush1.xpose.msra.mxu0 0.0
        %1227 = vmatprep.subr.mxu0 0.0
        %1228 = vmatpush1.xpose.msra.mxu0 0.0
        %1229 = vmatprep.subr.mxu0 0.0
        %1230 = vmatpush1.xpose.msra.mxu0 0.0
        %1231 = vmatprep.subr.mxu0 0.0
        %1232 = vmatpush1.xpose.msra.mxu0 0.0
        %1233 = vmatprep.subr.mxu0 0.0
        %1234 = vmatpush1.xpose.msra.mxu0 0.0
        %1235 = vmatprep.subr.mxu0 0.0
        %1236 = vmatpush1.xpose.msra.mxu0 0.0
        %1237 = vmatprep.subr.mxu0 0.0
        %1238 = vmatpush1.xpose.msra.mxu0 0.0
        %1239 = vmatprep.subr.mxu0 0.0
        %1240 = vmatpush1.xpose.msra.mxu0 0.0
        %1241 = vmatprep.subr.mxu0 0.0
        %1242 = vmatpush1.xpose.msra.mxu0 0.0
        %1243 = vmatprep.subr.mxu0 0.0
        %1244 = vmatpush1.xpose.msra.mxu0 0.0
        %1245 = vmatprep.subr.mxu0 0.0
        %1246 = vmatpush1.xpose.msra.mxu0 0.0
        %1247 = vmatprep.subr.mxu0 0.0
        %1248 = vmatpush1.xpose.msra.mxu0 0.0
        %1249 = vmatprep.subr.mxu0 0.0
        %1250 = vmatpush1.xpose.msra.mxu0 0.0
        %1251 = vmatprep.subr.mxu0 0.0
        %1252 = vmatpush1.xpose.msra.mxu0 0.0
        %1253 = vmatprep.subr.mxu0 0.0
        %1254 = vmatpush1.xpose.msra.mxu0 0.0
        %1255 = vmatprep.subr.mxu0 0.0
        %1256 = vmatpush1.xpose.msra.mxu0 0.0
        %1257 = vmatprep.subr.mxu0 0.0
        %1258 = vmatpush1.xpose.msra.mxu0 0.0
        %1259 = vmatprep.subr.mxu0 0.0
        %1260 = vmatpush1.xpose.msra.mxu0 0.0
        %1261 = vmatprep.subr.mxu0 0.0
        %1262 = vmatpush1.xpose.msra.mxu0 0.0
        %1263 = vmatprep.subr.mxu0 0.0
        %1264 = vmatpush1.xpose.msra.mxu0 0.0
        %1265 = vmatprep.subr.mxu0 0.0
        %1266 = vmatpush1.xpose.msra.mxu0 0.0
        %1267 = vmatprep.mubr.f32.mxu0 0.0
        %1268 = vmatmul.mubr.f32.gmra.mrb[0].mxu0 %v1199
        %v1269 = vpop.f32.mrb[0].mxu0
        %v1270 = vadd.f32 0.0, %v1269
        %v1271 = vpop.f32.mrb[0].mxu0
        %1272 = vdwg.mxu0
        %v1273 = vsel %vm703, %v1270, -inf
        %1274 = vmax.xlane.f32.xlu0 %v1273
        %v1275 = vpop.xlane.xlu0 %1274
        %v1276 = vsub.f32 %v1270, %v1275
        %v1277 = vmul.f32 %v1276, 1.442695
        %v1278 = vpow.pop %v1277
        %v1279 = vsel %vm703, %v1278, 0.0
        %1280 = vadd.xlane.f32.xlu0 %v1279
        %v1281 = vpop.xlane.xlu0 %1280
        %v1282 = vrcp.pop %v1281
        %v1283 = vmul.f32 %v1278, %v1282
        %s1284 = scalar_lea.vmem %s489, 24 [#allocation13]
        %1285 = vst.msk [vmem:[%s1284] sm:$0xff] %vm703, %v1283
        %v1288 = vsel %vm703, %v1283, 0
        %1290 = vmatprep.subr.mxu0 0.0
        %1291 = vmatpush1.msra.mxu0 %v1198
        %1292 = vmatprep.subr.mxu0 0.0
        %1293 = vmatpush1.msra.mxu0 0.0
        %1294 = vmatprep.subr.mxu0 0.0
        %1295 = vmatpush1.msra.mxu0 0.0
        %1296 = vmatprep.subr.mxu0 0.0
        %1297 = vmatpush1.msra.mxu0 0.0
        %1298 = vmatprep.subr.mxu0 0.0
        %1299 = vmatpush1.msra.mxu0 0.0
        %1300 = vmatprep.subr.mxu0 0.0
        %1301 = vmatpush1.msra.mxu0 0.0
        %1302 = vmatprep.subr.mxu0 0.0
        %1303 = vmatpush1.msra.mxu0 0.0
        %1304 = vmatprep.subr.mxu0 0.0
        %1305 = vmatpush1.msra.mxu0 0.0
        %1306 = vmatprep.subr.mxu0 0.0
        %1307 = vmatpush1.msra.mxu0 0.0
        %1308 = vmatprep.subr.mxu0 0.0
        %1309 = vmatpush1.msra.mxu0 0.0
        %1310 = vmatprep.subr.mxu0 0.0
        %1311 = vmatpush1.msra.mxu0 0.0
        %1312 = vmatprep.subr.mxu0 0.0
        %1313 = vmatpush1.msra.mxu0 0.0
        %1314 = vmatprep.subr.mxu0 0.0
        %1315 = vmatpush1.msra.mxu0 0.0
        %1316 = vmatprep.subr.mxu0 0.0
        %1317 = vmatpush1.msra.mxu0 0.0
        %1318 = vmatprep.subr.mxu0 0.0
        %1319 = vmatpush1.msra.mxu0 0.0
        %1320 = vmatprep.subr.mxu0 0.0
        %1321 = vmatpush1.msra.mxu0 0.0
        %1322 = vmatprep.subr.mxu0 0.0
        %1323 = vmatpush1.msra.mxu0 0.0
        %1324 = vmatprep.subr.mxu0 0.0
        %1325 = vmatpush1.msra.mxu0 0.0
        %1326 = vmatprep.subr.mxu0 0.0
        %1327 = vmatpush1.msra.mxu0 0.0
        %1328 = vmatprep.subr.mxu0 0.0
        %1329 = vmatpush1.msra.mxu0 0.0
        %1330 = vmatprep.subr.mxu0 0.0
        %1331 = vmatpush1.msra.mxu0 0.0
        %1332 = vmatprep.subr.mxu0 0.0
        %1333 = vmatpush1.msra.mxu0 0.0
        %1334 = vmatprep.subr.mxu0 0.0
        %1335 = vmatpush1.msra.mxu0 0.0
        %1336 = vmatprep.subr.mxu0 0.0
        %1337 = vmatpush1.msra.mxu0 0.0
        %1338 = vmatprep.subr.mxu0 0.0
        %1339 = vmatpush1.msra.mxu0 0.0
        %1340 = vmatprep.subr.mxu0 0.0
        %1341 = vmatpush1.msra.mxu0 0.0
        %1342 = vmatprep.subr.mxu0 0.0
        %1343 = vmatpush1.msra.mxu0 0.0
        %1344 = vmatprep.subr.mxu0 0.0
        %1345 = vmatpush1.msra.mxu0 0.0
        %1346 = vmatprep.subr.mxu0 0.0
        %1347 = vmatpush1.msra.mxu0 0.0
        %1348 = vmatprep.subr.mxu0 0.0
        %1349 = vmatpush1.msra.mxu0 0.0
        %1350 = vmatprep.subr.mxu0 0.0
        %1351 = vmatpush1.msra.mxu0 0.0
        %1352 = vmatprep.subr.mxu0 0.0
        %1353 = vmatpush1.msra.mxu0 0.0
        %1354 = vmatprep.mubr.f32.mxu0 0.0
        %1355 = vmatmul.mubr.f32.gmra.mrb[0].mxu0 %v1288
        %v1356 = vpop.f32.mrb[0].mxu0
        %v1357 = vadd.f32 0.0, %v1356
        %v1358 = vpop.f32.mrb[0].mxu0
        %1359 = vdwg.mxu0
        %1361 = vrot.lane.b32.xlu0 %v1027, 8
        %v1362 = vpop.permute.xlu0 %1361
        %1365 = vrot.lane.b32.xlu0 %v1192, 16
        %v1366 = vpop.permute.xlu0 %1365
        %1369 = vrot.lane.b32.xlu0 %v1357, 24
        %v1370 = vpop.permute.xlu0 %1369
        %v1372 = vsel %vm703, %v862, %v1362
        %vm1373 = vcmask 130048
        %v1374 = vsel %vm1373, %v1372, %v1366
        %vm1375 = vcmask 195584
        %v1376 = vsel %vm1375, %v1374, %v1370
        %v1377 = vld [vmem:[#allocation3] sm:$0xff]
        %v1378 = vld [vmem:[#allocation10] sm:$0xff]
        %v1379 = vld [vmem:[#allocation10 + $0x8] sm:$0xff]
        %v1380 = vld [vmem:[#allocation10 + $0x10] sm:$0xff]
        %v1381 = vld [vmem:[#allocation10 + $0x18] sm:$0xff]
        %v1383 = vsel %vm547, %v1376, 0
        %1385 = vmatprep.subr.mxu0 0.0
        %1386 = vmatpush1.msra.mxu0 %v1378
        %1387 = vmatprep.subr.mxu0 0.0
        %1388 = vmatpush1.msra.mxu0 %v1379
        %1389 = vmatprep.subr.mxu0 0.0
        %1390 = vmatpush1.msra.mxu0 %v1380
        %1391 = vmatprep.subr.mxu0 0.0
        %1392 = vmatpush1.msra.mxu0 %v1381
        %1393 = vmatprep.subr.mxu0 0.0
        %1394 = vmatpush1.msra.mxu0 0.0
        %1395 = vmatprep.subr.mxu0 0.0
        %1396 = vmatpush1.msra.mxu0 0.0
        %1397 = vmatprep.subr.mxu0 0.0
        %1398 = vmatpush1.msra.mxu0 0.0
        %1399 = vmatprep.subr.mxu0 0.0
        %1400 = vmatpush1.msra.mxu0 0.0
        %1401 = vmatprep.subr.mxu0 0.0
        %1402 = vmatpush1.msra.mxu0 0.0
        %1403 = vmatprep.subr.mxu0 0.0
        %1404 = vmatpush1.msra.mxu0 0.0
        %1405 = vmatprep.subr.mxu0 0.0
        %1406 = vmatpush1.msra.mxu0 0.0
        %1407 = vmatprep.subr.mxu0 0.0
        %1408 = vmatpush1.msra.mxu0 0.0
        %1409 = vmatprep.subr.mxu0 0.0
        %1410 = vmatpush1.msra.mxu0 0.0
        %1411 = vmatprep.subr.mxu0 0.0
        %1412 = vmatpush1.msra.mxu0 0.0
        %1413 = vmatprep.subr.mxu0 0.0
        %1414 = vmatpush1.msra.mxu0 0.0
        %1415 = vmatprep.subr.mxu0 0.0
        %1416 = vmatpush1.msra.mxu0 0.0
        %1417 = vmatprep.subr.mxu0 0.0
        %1418 = vmatpush1.msra.mxu0 0.0
        %1419 = vmatprep.subr.mxu0 0.0
        %1420 = vmatpush1.msra.mxu0 0.0
        %1421 = vmatprep.subr.mxu0 0.0
        %1422 = vmatpush1.msra.mxu0 0.0
        %1423 = vmatprep.subr.mxu0 0.0
        %1424 = vmatpush1.msra.mxu0 0.0
        %1425 = vmatprep.subr.mxu0 0.0
        %1426 = vmatpush1.msra.mxu0 0.0
        %1427 = vmatprep.subr.mxu0 0.0
        %1428 = vmatpush1.msra.mxu0 0.0
        %1429 = vmatprep.subr.mxu0 0.0
        %1430 = vmatpush1.msra.mxu0 0.0
        %1431 = vmatprep.subr.mxu0 0.0
        %1432 = vmatpush1.msra.mxu0 0.0
        %1433 = vmatprep.subr.mxu0 0.0
        %1434 = vmatpush1.msra.mxu0 0.0
        %1435 = vmatprep.subr.mxu0 0.0
        %1436 = vmatpush1.msra.mxu0 0.0
        %1437 = vmatprep.subr.mxu0 0.0
        %1438 = vmatpush1.msra.mxu0 0.0
        %1439 = vmatprep.subr.mxu0 0.0
        %1440 = vmatpush1.msra.mxu0 0.0
        %1441 = vmatprep.subr.mxu0 0.0
        %1442 = vmatpush1.msra.mxu0 0.0
        %1443 = vmatprep.subr.mxu0 0.0
        %1444 = vmatpush1.msra.mxu0 0.0
        %1445 = vmatprep.subr.mxu0 0.0
        %1446 = vmatpush1.msra.mxu0 0.0
        %1447 = vmatprep.subr.mxu0 0.0
        %1448 = vmatpush1.msra.mxu0 0.0
        %1449 = vmatprep.mubr.f32.mxu0 0.0
        %1450 = vmatmul.mubr.f32.gmra.mrb[0].mxu0 %v1383
        %v1451 = vpop.f32.mrb[0].mxu0
        %v1452 = vadd.f32 0.0, %v1451
        %v1453 = vpop.f32.mrb[0].mxu0
        %1454 = vdwg.mxu0
        %v1455 = vadd.f32 %v1377, %v1452
        %1456 = vst.msk [vmem:[#allocation3] sm:$0xff] %vm547, %v1455
        // Predicated region
        $region77: #{tpu_custom_call.1} parent=55 // pred_check
          %p1457 = pneg %p497
        $region78: #{tpu_custom_call.1} parent=55 // pred_check_branch
          %1459 = sbr.rel (%p1457) target = $region80
        $region79: #{tpu_custom_call.1} parent=55 // pred_region
          %v1460 = vld [vmem:[#allocation3] sm:$0xff]
          %v1461 = vld [vmem:[%s8] sm:$0x1]
          %v1463 = vlaneseq
          %v1464 = vshrl.u32 %v1463, 7
          %v1465 = vsub.s32 0, %v1464
          %v1466 = vrot.slane %v1461, %v1465
          %v1468 = vadd.f32 %v1460, %v1466
          %v1469 = vld [vmem:[%s430] sm:$0xff]
          %v1470 = vadd.f32 %v1468, %v1469
          %1471 = vst.msk [vmem:[%s482] sm:$0xff] %vm547, %v1470
        $region80: #{tpu_custom_call.1} parent=55 // pred_fallthru
          _
        %s1472 = sand.u32 %s272, 1
        %s1473 = scalar_lea.sflag [#allocation6], %s1472
        %s1474 = sand.u32 %s272, 1
        %s1475 = smul.addr %s1474, 8
        %s1476 = scalar_lea.vmem [#allocation12], %s1475
        %s1477 = sand.u32 %s300, 1
        %s1478 = scalar_lea.sflag [#allocation14], %s1477
        %s1479 = sand.u32 %s300, 1
        %s1480 = smul.addr %s1479, 32
        %s1481 = scalar_lea.vmem [#allocation13], %s1480
        // Predicated region
        $region81: #{tpu_custom_call.1} parent=55 // pred_check
          %p1482 = pneg %p282
        $region82: #{tpu_custom_call.1} parent=55 // pred_check_branch
          %1484 = sbr.rel (%p1482) target = $region84
        $region83: #{tpu_custom_call.1} parent=55 // pred_region
          %s1486 = ssub.s32 128, 128
          %1487 = vsyncadd %s1473, %s1486
          %s1488 = smul.addr %s37, 128
          %s1489 = scalar_lea.hbm %s9, %s1488
          %s1491 = sshll.u32 %s1476, 4
          %s1492 = int_to_ptr.vmem [resolvable:$true] %s1491
          %1494 = dma.vmem_to_hbm [thread:$0]  %s1492, 128, %s1489, %s1473
        $region84: #{tpu_custom_call.1} parent=55 // pred_fallthru
          _
        // Predicated region
        $region85: #{tpu_custom_call.1} parent=55 // pred_check
          %p1495 = pneg %p310
        $region86: #{tpu_custom_call.1} parent=55 // pred_check_branch
          %1497 = sbr.rel (%p1495) target = $region88
        $region87: #{tpu_custom_call.1} parent=55 // pred_region
          %s1498 = smul.u32 4, %s38
          %s1500 = ssub.s32 512, 512
          %1501 = vsyncadd %s1478, %s1500
          %s1502 = smul.addr %s37, 4
          %s1503 = sadd.s32 %s1498, %s1502
          %s1504 = smul.addr %s1503, 128
          %s1505 = scalar_lea.hbm %s10, %s1504
          %s1506 = sshll.u32 %s1481, 4
          %s1507 = int_to_ptr.vmem [resolvable:$true] %s1506
          %1512 = dma.vmem_to_hbm [thread:$0]  %s1507, 512, %s1505, %s1478, 128, 128, 8
        $region88: #{tpu_custom_call.1} parent=55 // pred_fallthru
          _
      $region56: #{tpu_custom_call.1} parent=5 // pred_fallthru
        _
      %p1513 = scmp.le.s32.totalorder 2, %s28
      // Predicated region
      $region89: #{tpu_custom_call.1} parent=5 // pred_check
        %p1514 = pneg %p1513
      $region90: #{tpu_custom_call.1} parent=5 // pred_check_branch
        %1516 = sbr.rel (%p1514) target = $region92
      $region91: #{tpu_custom_call.1} parent=5 // pred_region
        %s1517 = ssub.s32 %s28, 2
        // Predicated region
        $region93: #{tpu_custom_call.1} parent=91 // pred_check
          %p1518 = pneg %p288
        $region94: #{tpu_custom_call.1} parent=91 // pred_check_branch
          %1520 = sbr.rel (%p1518) target = $region96
        $region95: #{tpu_custom_call.1} parent=91 // pred_region
          %s1521 = sand.u32 %s273, 1
          %s1522 = scalar_lea.sflag [#allocation6], %s1521
          %s1523 = sand.u32 %s273, 1
          %s1524 = smul.addr %s1523, 8
          %s1525 = scalar_lea.vmem [#allocation12], %s1524
          %1526 = dma.done %s1522, 128
        $region96: #{tpu_custom_call.1} parent=91 // pred_fallthru
          _
        // Predicated region
        $region97: #{tpu_custom_call.1} parent=91 // pred_check
          %p1527 = pneg %p316
        $region98: #{tpu_custom_call.1} parent=91 // pred_check_branch
          %1529 = sbr.rel (%p1527) target = $region100
        $region99: #{tpu_custom_call.1} parent=91 // pred_region
          %s1530 = sand.u32 %s301, 1
          %s1531 = scalar_lea.sflag [#allocation14], %s1530
          %s1532 = sand.u32 %s301, 1
          %s1533 = smul.addr %s1532, 32
          %s1534 = scalar_lea.vmem [#allocation13], %s1533
          %1535 = dma.done %s1531, 512
        $region100: #{tpu_custom_call.1} parent=91 // pred_fallthru
          _
      $region92: #{tpu_custom_call.1} parent=5 // pred_fallthru
        _
    $region6: #{tpu_custom_call.1} parent=1 // loop_footer
      %s32 = sadd.s32 1, %s28
    $region7: #{tpu_custom_call.1} parent=1 // loop_footer_branch
      %27 = sbr.rel target = $region3
    $region8: #{tpu_custom_call.1} parent=1 // loop_exit
      _
    %1536 = vsyncpa [#allocation5], 1
    %s1537 = scalar_lea.sflag [#allocation5], 1
    %1538 = vsyncpa %s1537, 1
    %1539 = vsyncpa [#allocation8], 1
    %1540 = vsyncpa [#allocation11], 1
    %1541 = vsyncpa [#allocation6], 1
    %s1542 = scalar_lea.sflag [#allocation6], 1
    %1543 = vsyncpa %s1542, 1
    %1544 = vsyncpa [#allocation14], 1
    %s1545 = scalar_lea.sflag [#allocation14], 1
    %1546 = vsyncpa %s1545, 1

</llo_original>
